<compile_context>
chip_gen: v5e
topology: v5e:2x2
jax: 0.10.0
libtpu: 0.0.40
codegen_flags: <defaults>
</compile_context>

<pallas_src>
import functools
import math

import jax
import jax.numpy as jnp
from jax import lax
from jax.experimental import pallas as pl
from jax.experimental.pallas import tpu as pltpu

MATMUL_DTYPE = jnp.bfloat16   # MXU operand dtype (accumulation stays f32)
LN_EPS = 1e-5


def _pick_tile(m, target=512):
    """Largest row-tile <= target that divides m (multiple of 8), else m."""
    if m <= target:
        return m
    for t in range(target, 7, -8):
        if m % t == 0 and t % 8 == 0:
            return t
    return m


def _layernorm(z, g, b, eps):
    mean = jnp.mean(z, axis=-1, keepdims=True)
    c = z - mean
    var = jnp.mean(c * c, axis=-1, keepdims=True)
    return c * lax.rsqrt(var + eps) * g + b


# ----------------------------------------------------------------------------
# Kernel 1: fused complex linear (used for the concatenated Q|K|V projection)
#   3-mult complex matmul: t1 = xr@wr, t2 = xi@wi, t3 = (xr+xi)@(wr+wi)
#   out_r = t1 - t2 + (br - bi);  out_i = t3 - t1 - t2 + (br + bi)
# ----------------------------------------------------------------------------
def _complex_linear_kernel(xr_ref, xi_ref, wr_ref, wi_ref, ws_ref,
                           bm_ref, bp_ref, or_ref, oi_ref):
    xr = xr_ref[...]
    xi = xi_ref[...]
    xs = (xr + xi).astype(MATMUL_DTYPE)
    t1 = jnp.dot(xr.astype(MATMUL_DTYPE), wr_ref[...],
                 preferred_element_type=jnp.float32)
    t2 = jnp.dot(xi.astype(MATMUL_DTYPE), wi_ref[...],
                 preferred_element_type=jnp.float32)
    t3 = jnp.dot(xs, ws_ref[...], preferred_element_type=jnp.float32)
    or_ref[...] = t1 - t2 + bm_ref[...]
    oi_ref[...] = t3 - t1 - t2 + bp_ref[...]


def fused_complex_linear(xr, xi, wr, wi, br, bi):
    """xr/xi: (M, K); wr/wi: (K, N); br/bi: (N,). Tiled over M, 'parallel'."""
    M, K = xr.shape
    N = wr.shape[1]
    tm = _pick_tile(M)
    wr_m = wr.astype(MATMUL_DTYPE)
    wi_m = wi.astype(MATMUL_DTYPE)
    ws_m = (wr + wi).astype(MATMUL_DTYPE)
    bm = (br - bi).reshape(1, N)
    bp = (br + bi).reshape(1, N)

    x_spec = pl.BlockSpec((tm, K), lambda i: (i, 0))
    w_spec = pl.BlockSpec((K, N), lambda i: (0, 0))
    b_spec = pl.BlockSpec((1, N), lambda i: (0, 0))
    o_spec = pl.BlockSpec((tm, N), lambda i: (i, 0))
    return pl.pallas_call(
        _complex_linear_kernel,
        out_shape=(jax.ShapeDtypeStruct((M, N), jnp.float32),) * 2,
        grid=(M // tm,),
        in_specs=[x_spec, x_spec, w_spec, w_spec, w_spec, b_spec, b_spec],
        out_specs=(o_spec, o_spec),
        compiler_params=pltpu.CompilerParams(
            dimension_semantics=("parallel",)),
    )(xr, xi, wr_m, wi_m, ws_m, bm, bp)


# ----------------------------------------------------------------------------
# Kernel 2: per-batch complex multi-head attention.
#   Heads are looped inside the kernel (static H) so Q/K/V never transpose in
#   HBM and the output store is D-wide (lane dense).  Scores are computed with
#   a single matmul per head over the concatenated real|imag contraction.
# ----------------------------------------------------------------------------
def _attention_kernel(qkv_r_ref, qkv_i_ref, or_ref, oi_ref, *,
                      n_heads, d_model, scale):
    dk = d_model // n_heads
    qkv_r = qkv_r_ref[0]   # (S, 3D)
    qkv_i = qkv_i_ref[0]
    out_r_heads = []
    out_i_heads = []
    for h in range(n_heads):
        lo = h * dk
        q_r = qkv_r[:, lo:lo + dk]
        q_i = qkv_i[:, lo:lo + dk]
        k_r = qkv_r[:, d_model + lo:d_model + lo + dk]
        k_i = qkv_i[:, d_model + lo:d_model + lo + dk]
        v_r = qkv_r[:, 2 * d_model + lo:2 * d_model + lo + dk]
        v_i = qkv_i[:, 2 * d_model + lo:2 * d_model + lo + dk]

        # Re(Q K^H) = Qr Kr^T + Qi Ki^T  ==  [Qr|Qi] @ [Kr|Ki]^T  (one matmul,
        # 2*dk contraction, expressed via dot_general to avoid an explicit .T).
        q_cat = jnp.concatenate([q_r, q_i], axis=-1).astype(MATMUL_DTYPE)
        k_cat = jnp.concatenate([k_r, k_i], axis=-1).astype(MATMUL_DTYPE)
        s = lax.dot_general(q_cat, k_cat, (((1,), (1,)), ((), ())),
                            preferred_element_type=jnp.float32) * scale

        m = jnp.max(s, axis=-1, keepdims=True)
        p = jnp.exp(s - m)
        inv = pl.reciprocal(jnp.sum(p, axis=-1, keepdims=True), approx=True)
        a = (p * inv).astype(MATMUL_DTYPE)

        out_r_heads.append(jnp.dot(a, v_r.astype(MATMUL_DTYPE),
                                   preferred_element_type=jnp.float32))
        out_i_heads.append(jnp.dot(a, v_i.astype(MATMUL_DTYPE),
                                   preferred_element_type=jnp.float32))
    or_ref[0] = jnp.concatenate(out_r_heads, axis=-1)
    oi_ref[0] = jnp.concatenate(out_i_heads, axis=-1)


def complex_attention(qkv_r, qkv_i, n_heads):
    """qkv_r/qkv_i: (B, S, 3D).  Returns context (B, S, D) real/imag."""
    B, S, threeD = qkv_r.shape
    d_model = threeD // 3
    dk = d_model // n_heads
    kernel = functools.partial(_attention_kernel, n_heads=n_heads,
                               d_model=d_model, scale=1.0 / math.sqrt(dk))
    in_spec = pl.BlockSpec((1, S, threeD), lambda b: (b, 0, 0))
    out_spec = pl.BlockSpec((1, S, d_model), lambda b: (b, 0, 0))
    return pl.pallas_call(
        kernel,
        out_shape=(jax.ShapeDtypeStruct((B, S, d_model), jnp.float32),) * 2,
        grid=(B,),
        in_specs=[in_spec, in_spec],
        out_specs=(out_spec, out_spec),
        compiler_params=pltpu.CompilerParams(
            dimension_semantics=("parallel",)),
    )(qkv_r, qkv_i)


# ----------------------------------------------------------------------------
# Kernel 3: output projection + residual add + LayerNorm1 (fused epilogue)
# ----------------------------------------------------------------------------
def _oproj_addnorm_kernel(ar_ref, ai_ref, xr_ref, xi_ref,
                          wr_ref, wi_ref, ws_ref, bm_ref, bp_ref,
                          gr_ref, br_ref, gi_ref, bi_ref,
                          or_ref, oi_ref, *, eps):
    ar = ar_ref[...]
    ai = ai_ref[...]
    a_s = (ar + ai).astype(MATMUL_DTYPE)
    t1 = jnp.dot(ar.astype(MATMUL_DTYPE), wr_ref[...],
                 preferred_element_type=jnp.float32)
    t2 = jnp.dot(ai.astype(MATMUL_DTYPE), wi_ref[...],
                 preferred_element_type=jnp.float32)
    t3 = jnp.dot(a_s, ws_ref[...], preferred_element_type=jnp.float32)
    proj_r = t1 - t2 + bm_ref[...]
    proj_i = t3 - t1 - t2 + bp_ref[...]
    zr = xr_ref[...] + proj_r            # residual (dropout = identity)
    zi = xi_ref[...] + proj_i
    or_ref[...] = _layernorm(zr, gr_ref[...], br_ref[...], eps)
    oi_ref[...] = _layernorm(zi, gi_ref[...], bi_ref[...], eps)


def oproj_add_layernorm(ar, ai, xr, xi, o_params, ln_params, eps=LN_EPS):
    M, D = ar.shape
    wr, wi, br, bi = o_params
    gr, br_ln, gi, bi_ln = ln_params
    tm = _pick_tile(M)
    wr_m = wr.astype(MATMUL_DTYPE)
    wi_m = wi.astype(MATMUL_DTYPE)
    ws_m = (wr + wi).astype(MATMUL_DTYPE)
    bm = (br - bi).reshape(1, D)
    bp = (br + bi).reshape(1, D)
    row = lambda v: v.reshape(1, D)

    x_spec = pl.BlockSpec((tm, D), lambda i: (i, 0))
    w_spec = pl.BlockSpec((D, D), lambda i: (0, 0))
    r_spec = pl.BlockSpec((1, D), lambda i: (0, 0))
    kernel = functools.partial(_oproj_addnorm_kernel, eps=eps)
    return pl.pallas_call(
        kernel,
        out_shape=(jax.ShapeDtypeStruct((M, D), jnp.float32),) * 2,
        grid=(M // tm,),
        in_specs=[x_spec, x_spec, x_spec, x_spec,
                  w_spec, w_spec, w_spec, r_spec, r_spec,
                  r_spec, r_spec, r_spec, r_spec],
        out_specs=(x_spec, x_spec),
        compiler_params=pltpu.CompilerParams(
            dimension_semantics=("parallel",)),
    )(ar, ai, xr, xi, wr_m, wi_m, ws_m, bm, bp,
      row(gr), row(br_ln), row(gi), row(bi_ln))


# ----------------------------------------------------------------------------
# Kernel 4: FF1 -> CReLU -> FF2 + residual add + LayerNorm2 (hidden stays in VMEM)
# ----------------------------------------------------------------------------
def _ffn_addnorm_kernel(nr_ref, ni_ref,
                        w1r_ref, w1i_ref, w1s_ref, b1m_ref, b1p_ref,
                        w2r_ref, w2i_ref, w2s_ref, b2m_ref, b2p_ref,
                        gr_ref, br_ref, gi_ref, bi_ref,
                        or_ref, oi_ref, *, eps):
    nr = nr_ref[...]
    ni = ni_ref[...]
    ns = (nr + ni).astype(MATMUL_DTYPE)
    t1 = jnp.dot(nr.astype(MATMUL_DTYPE), w1r_ref[...],
                 preferred_element_type=jnp.float32)
    t2 = jnp.dot(ni.astype(MATMUL_DTYPE), w1i_ref[...],
                 preferred_element_type=jnp.float32)
    t3 = jnp.dot(ns, w1s_ref[...], preferred_element_type=jnp.float32)
    # CReLU (f32) -- see TODO(synk) at top of file.
    hr = jnp.maximum(t1 - t2 + b1m_ref[...], 0.0)
    hi = jnp.maximum(t3 - t1 - t2 + b1p_ref[...], 0.0)

    hs = (hr + hi).astype(MATMUL_DTYPE)
    u1 = jnp.dot(hr.astype(MATMUL_DTYPE), w2r_ref[...],
                 preferred_element_type=jnp.float32)
    u2 = jnp.dot(hi.astype(MATMUL_DTYPE), w2i_ref[...],
                 preferred_element_type=jnp.float32)
    u3 = jnp.dot(hs, w2s_ref[...], preferred_element_type=jnp.float32)
    fr = u1 - u2 + b2m_ref[...]
    fi = u3 - u1 - u2 + b2p_ref[...]

    zr = nr + fr                         # residual (dropout = identity)
    zi = ni + fi
    or_ref[...] = _layernorm(zr, gr_ref[...], br_ref[...], eps)
    oi_ref[...] = _layernorm(zi, gi_ref[...], bi_ref[...], eps)


def ffn_add_layernorm(nr, ni, ff1_params, ff2_params, ln_params, eps=LN_EPS):
    M, D = nr.shape
    w1r, w1i, b1r, b1i = ff1_params
    w2r, w2i, b2r, b2i = ff2_params
    gr, br_ln, gi, bi_ln = ln_params
    FF = w1r.shape[1]
    tm = _pick_tile(M)

    w1r_m = w1r.astype(MATMUL_DTYPE)
    w1i_m = w1i.astype(MATMUL_DTYPE)
    w1s_m = (w1r + w1i).astype(MATMUL_DTYPE)
    b1m = (b1r - b1i).reshape(1, FF)
    b1p = (b1r + b1i).reshape(1, FF)
    w2r_m = w2r.astype(MATMUL_DTYPE)
    w2i_m = w2i.astype(MATMUL_DTYPE)
    w2s_m = (w2r + w2i).astype(MATMUL_DTYPE)
    b2m = (b2r - b2i).reshape(1, D)
    b2p = (b2r + b2i).reshape(1, D)
    rowD = lambda v: v.reshape(1, D)

    x_spec = pl.BlockSpec((tm, D), lambda i: (i, 0))
    w1_spec = pl.BlockSpec((D, FF), lambda i: (0, 0))
    w2_spec = pl.BlockSpec((FF, D), lambda i: (0, 0))
    b1_spec = pl.BlockSpec((1, FF), lambda i: (0, 0))
    bD_spec = pl.BlockSpec((1, D), lambda i: (0, 0))
    kernel = functools.partial(_ffn_addnorm_kernel, eps=eps)
    return pl.pallas_call(
        kernel,
        out_shape=(jax.ShapeDtypeStruct((M, D), jnp.float32),) * 2,
        grid=(M // tm,),
        in_specs=[x_spec, x_spec,
                  w1_spec, w1_spec, w1_spec, b1_spec, b1_spec,
                  w2_spec, w2_spec, w2_spec, bD_spec, bD_spec,
                  bD_spec, bD_spec, bD_spec, bD_spec],
        out_specs=(x_spec, x_spec),
        compiler_params=pltpu.CompilerParams(
            dimension_semantics=("parallel",)),
    )(nr, ni,
      w1r_m, w1i_m, w1s_m, b1m, b1p,
      w2r_m, w2i_m, w2s_m, b2m, b2p,
      rowD(gr), rowD(br_ln), rowD(gi), rowD(bi_ln))


# ----------------------------------------------------------------------------
# Full encoder block forward
# ----------------------------------------------------------------------------
def encoder_block_forward(xr, xi, params, n_heads):
    B, S, D = xr.shape
    M = B * S
    xr2 = xr.reshape(M, D)
    xi2 = xi.reshape(M, D)

    # ---- fused Q/K/V projection: one complex matmul against [Wq|Wk|Wv] ----
    wq_r, wq_i, bq_r, bq_i = params["q"]
    wk_r, wk_i, bk_r, bk_i = params["k"]
    wv_r, wv_i, bv_r, bv_i = params["v"]
    wqkv_r = jnp.concatenate([wq_r, wk_r, wv_r], axis=1)
    wqkv_i = jnp.concatenate([wq_i, wk_i, wv_i], axis=1)
    bqkv_r = jnp.concatenate([bq_r, bk_r, bv_r], axis=0)
    bqkv_i = jnp.concatenate([bq_i, bk_i, bv_i], axis=0)
    qkv_r, qkv_i = fused_complex_linear(xr2, xi2, wqkv_r, wqkv_i,
                                        bqkv_r, bqkv_i)

    # ---- per-batch attention, heads looped in-kernel (no HBM transposes) ----
    ar, ai = complex_attention(qkv_r.reshape(B, S, 3 * D),
                               qkv_i.reshape(B, S, 3 * D), n_heads)

    # ---- output projection + residual + LayerNorm1 (fused) ----
    n1r, n1i = oproj_add_layernorm(ar.reshape(M, D), ai.reshape(M, D),
                                   xr2, xi2, params["o"], params["ln1"])

    # ---- FFN (CReLU) + residual + LayerNorm2 (fused; hidden stays in VMEM) ----
    out_r, out_i = ffn_add_layernorm(n1r, n1i, params["ff1"], params["ff2"],
                                     params["ln2"])
    return out_r.reshape(B, S, D), out_i.reshape(B, S, D)


# ----------------------------------------------------------------------------
# Deterministic parameter init
# ----------------------------------------------------------------------------
def init_complex_linear(key, d_in, d_out):
    k1, k2, k3, k4 = jax.random.split(key, 4)
    bound = 1.0 / math.sqrt(d_in)
    wr = jax.random.uniform(k1, (d_in, d_out), jnp.float32, -bound, bound)
    wi = jax.random.uniform(k2, (d_in, d_out), jnp.float32, -bound, bound)
    br = jax.random.uniform(k3, (d_out,), jnp.float32, -bound, bound)
    bi = jax.random.uniform(k4, (d_out,), jnp.float32, -bound, bound)
    return (wr, wi, br, bi)


def init_layernorm(d_model):
    # PyTorch nn.LayerNorm default: weight = 1, bias = 0 (real and imag LN)
    return (jnp.ones((d_model,), jnp.float32), jnp.zeros((d_model,), jnp.float32),
            jnp.ones((d_model,), jnp.float32), jnp.zeros((d_model,), jnp.float32))


if __name__ == "__main__":
    B, S, D, H, FF = 2, 8, 32, 4, 64

    key = jax.random.PRNGKey(0)
    keys = jax.random.split(key, 8)

    params = {
        "q": init_complex_linear(keys[0], D, D),
        "k": init_complex_linear(keys[1], D, D),
        "v": init_complex_linear(keys[2], D, D),
        "o": init_complex_linear(keys[3], D, D),
        "ff1": init_complex_linear(keys[4], D, FF),
        "ff2": init_complex_linear(keys[5], FF, D),
        "ln1": init_layernorm(D),
        "ln2": init_layernorm(D),
    }

    x_real = jax.random.normal(keys[6], (B, S, D), jnp.float32)
    x_imag = jax.random.normal(keys[7], (B, S, D), jnp.float32)

    fwd = jax.jit(functools.partial(encoder_block_forward, n_heads=H))
    out_r, out_i = fwd(x_real, x_imag, params)
    jax.block_until_ready((out_r, out_i))

    assert out_r.shape == (B, S, D) and out_i.shape == (B, S, D)
    assert jnp.all(jnp.isfinite(out_r)) and jnp.all(jnp.isfinite(out_i))
    print("KERNEL_OK")
</pallas_src>

<mosaic_0001>
module attributes {stable_mosaic.version = 11 : i64} {
  func.func @_complex_linear_kernel(%arg0: i32, %arg1: memref<16x32xf32, #tpu.memory_space<vmem>>, %arg2: memref<16x32xf32, #tpu.memory_space<vmem>>, %arg3: memref<32x96xbf16, #tpu.memory_space<vmem>>, %arg4: memref<32x96xbf16, #tpu.memory_space<vmem>>, %arg5: memref<32x96xbf16, #tpu.memory_space<vmem>>, %arg6: memref<1x96xf32, #tpu.memory_space<vmem>>, %arg7: memref<1x96xf32, #tpu.memory_space<vmem>>, %arg8: memref<16x96xf32, #tpu.memory_space<vmem>>, %arg9: memref<16x96xf32, #tpu.memory_space<vmem>>) attributes {dimension_semantics = [#tpu.dimension_semantics<parallel>], iteration_bounds = array<i64: 1>, scalar_prefetch = 0 : i64, scratch_operands = 0 : i64, tpu.core_type = #tpu.core_type<tc>, window_params = [{transform_indices = @transform_0, window_bounds = array<i64: 16, 32>}, {transform_indices = @transform_1, window_bounds = array<i64: 16, 32>}, {pipeline_mode = #tpu.pipeline_mode<synchronous>, transform_indices = @transform_2, window_bounds = array<i64: 32, 96>}, {pipeline_mode = #tpu.pipeline_mode<synchronous>, transform_indices = @transform_3, window_bounds = array<i64: 32, 96>}, {pipeline_mode = #tpu.pipeline_mode<synchronous>, transform_indices = @transform_4, window_bounds = array<i64: 32, 96>}, {pipeline_mode = #tpu.pipeline_mode<synchronous>, transform_indices = @transform_5, window_bounds = array<i64: 1, 96>}, {pipeline_mode = #tpu.pipeline_mode<synchronous>, transform_indices = @transform_6, window_bounds = array<i64: 1, 96>}, {transform_indices = @transform_7, window_bounds = array<i64: 16, 96>}, {transform_indices = @transform_8, window_bounds = array<i64: 16, 96>}]} {
    %c0 = arith.constant 0 : index
    %c0_0 = arith.constant 0 : index
    %0 = vector.load %arg1[%c0, %c0_0] : memref<16x32xf32, #tpu.memory_space<vmem>>, vector<16x32xf32>
    %c0_1 = arith.constant 0 : index
    %c0_2 = arith.constant 0 : index
    %1 = vector.load %arg2[%c0_1, %c0_2] : memref<16x32xf32, #tpu.memory_space<vmem>>, vector<16x32xf32>
    %2 = arith.addf %0, %1 : vector<16x32xf32>
    %3 = arith.truncf %2 : vector<16x32xf32> to vector<16x32xbf16>
    %4 = arith.truncf %0 : vector<16x32xf32> to vector<16x32xbf16>
    %c0_3 = arith.constant 0 : index
    %c0_4 = arith.constant 0 : index
    %5 = vector.load %arg3[%c0_3, %c0_4] : memref<32x96xbf16, #tpu.memory_space<vmem>>, vector<32x96xbf16>
    %cst = arith.constant dense<0.000000e+00> : vector<16x96xf32>
    %6 = tpu.matmul %4, %5, %cst {dimension_numbers = #tpu.dot_dimension_numbers<[1], [0], [0], [1], [0, 0, 1, 1], [], []>} : vector<16x32xbf16>, vector<32x96xbf16>, vector<16x96xf32> -> vector<16x96xf32>
    %7 = arith.truncf %1 : vector<16x32xf32> to vector<16x32xbf16>
    %c0_5 = arith.constant 0 : index
    %c0_6 = arith.constant 0 : index
    %8 = vector.load %arg4[%c0_5, %c0_6] : memref<32x96xbf16, #tpu.memory_space<vmem>>, vector<32x96xbf16>
    %cst_7 = arith.constant dense<0.000000e+00> : vector<16x96xf32>
    %9 = tpu.matmul %7, %8, %cst_7 {dimension_numbers = #tpu.dot_dimension_numbers<[1], [0], [0], [1], [0, 0, 1, 1], [], []>} : vector<16x32xbf16>, vector<32x96xbf16>, vector<16x96xf32> -> vector<16x96xf32>
    %c0_8 = arith.constant 0 : index
    %c0_9 = arith.constant 0 : index
    %10 = vector.load %arg5[%c0_8, %c0_9] : memref<32x96xbf16, #tpu.memory_space<vmem>>, vector<32x96xbf16>
    %cst_10 = arith.constant dense<0.000000e+00> : vector<16x96xf32>
    %11 = tpu.matmul %3, %10, %cst_10 {dimension_numbers = #tpu.dot_dimension_numbers<[1], [0], [0], [1], [0, 0, 1, 1], [], []>} : vector<16x32xbf16>, vector<32x96xbf16>, vector<16x96xf32> -> vector<16x96xf32>
    %12 = arith.subf %6, %9 : vector<16x96xf32>
    %c0_11 = arith.constant 0 : index
    %c0_12 = arith.constant 0 : index
    %13 = vector.load %arg6[%c0_11, %c0_12] : memref<1x96xf32, #tpu.memory_space<vmem>>, vector<1x96xf32>
    %14 = vector.broadcast %13 : vector<1x96xf32> to vector<16x96xf32>
    %15 = arith.addf %12, %14 : vector<16x96xf32>
    %c0_13 = arith.constant 0 : index
    %c0_14 = arith.constant 0 : index
    %16 = vector.load %arg8[%c0_13, %c0_14] : memref<16x96xf32, #tpu.memory_space<vmem>>, vector<16x96xf32>
    tpu.vector_store %arg8[%c0_13, %c0_14], %15 {strides = array<i32>} : memref<16x96xf32, #tpu.memory_space<vmem>>, vector<16x96xf32>,
    %17 = arith.subf %11, %6 : vector<16x96xf32>
    %18 = arith.subf %17, %9 : vector<16x96xf32>
    %c0_15 = arith.constant 0 : index
    %c0_16 = arith.constant 0 : index
    %19 = vector.load %arg7[%c0_15, %c0_16] : memref<1x96xf32, #tpu.memory_space<vmem>>, vector<1x96xf32>
    %20 = vector.broadcast %19 : vector<1x96xf32> to vector<16x96xf32>
    %21 = arith.addf %18, %20 : vector<16x96xf32>
    %c0_17 = arith.constant 0 : index
    %c0_18 = arith.constant 0 : index
    %22 = vector.load %arg9[%c0_17, %c0_18] : memref<16x96xf32, #tpu.memory_space<vmem>>, vector<16x96xf32>
    tpu.vector_store %arg9[%c0_17, %c0_18], %21 {strides = array<i32>} : memref<16x96xf32, #tpu.memory_space<vmem>>, vector<16x96xf32>,
    return
  }
  func.func @transform_0(%arg0: i32) -> (i32, i32) {
    %c0_i32 = arith.constant 0 : i32
    %c0_i32_0 = arith.constant 0 : i32
    return %arg0, %c0_i32 : i32, i32
  }
  func.func @transform_1(%arg0: i32) -> (i32, i32) {
    %c0_i32 = arith.constant 0 : i32
    %c0_i32_0 = arith.constant 0 : i32
    return %arg0, %c0_i32 : i32, i32
  }
  func.func @transform_2(%arg0: i32) -> (i32, i32) {
    %c0_i32 = arith.constant 0 : i32
    %c0_i32_0 = arith.constant 0 : i32
    %c0_i32_1 = arith.constant 0 : i32
    return %c0_i32, %c0_i32_0 : i32, i32
  }
  func.func @transform_3(%arg0: i32) -> (i32, i32) {
    %c0_i32 = arith.constant 0 : i32
    %c0_i32_0 = arith.constant 0 : i32
    %c0_i32_1 = arith.constant 0 : i32
    return %c0_i32, %c0_i32_0 : i32, i32
  }
  func.func @transform_4(%arg0: i32) -> (i32, i32) {
    %c0_i32 = arith.constant 0 : i32
    %c0_i32_0 = arith.constant 0 : i32
    %c0_i32_1 = arith.constant 0 : i32
    return %c0_i32, %c0_i32_0 : i32, i32
  }
  func.func @transform_5(%arg0: i32) -> (i32, i32) {
    %c0_i32 = arith.constant 0 : i32
    %c0_i32_0 = arith.constant 0 : i32
    %c0_i32_1 = arith.constant 0 : i32
    return %c0_i32, %c0_i32_0 : i32, i32
  }
  func.func @transform_6(%arg0: i32) -> (i32, i32) {
    %c0_i32 = arith.constant 0 : i32
    %c0_i32_0 = arith.constant 0 : i32
    %c0_i32_1 = arith.constant 0 : i32
    return %c0_i32, %c0_i32_0 : i32, i32
  }
  func.func @transform_7(%arg0: i32) -> (i32, i32) {
    %c0_i32 = arith.constant 0 : i32
    %c0_i32_0 = arith.constant 0 : i32
    return %arg0, %c0_i32 : i32, i32
  }
  func.func @transform_8(%arg0: i32) -> (i32, i32) {
    %c0_i32 = arith.constant 0 : i32
    %c0_i32_0 = arith.constant 0 : i32
    return %arg0, %c0_i32 : i32, i32
  }
}

module attributes {stable_mosaic.version = 11 : i64} {
  func.func @_attention_kernel(%arg0: i32, %arg1: memref<1x8x96xf32, #tpu.memory_space<vmem>>, %arg2: memref<1x8x96xf32, #tpu.memory_space<vmem>>, %arg3: memref<1x8x32xf32, #tpu.memory_space<vmem>>, %arg4: memref<1x8x32xf32, #tpu.memory_space<vmem>>) attributes {dimension_semantics = [#tpu.dimension_semantics<parallel>], iteration_bounds = array<i64: 2>, scalar_prefetch = 0 : i64, scratch_operands = 0 : i64, tpu.core_type = #tpu.core_type<tc>, window_params = [{transform_indices = @transform_0, window_bounds = array<i64: 1, 8, 96>}, {transform_indices = @transform_1, window_bounds = array<i64: 1, 8, 96>}, {transform_indices = @transform_2, window_bounds = array<i64: 1, 8, 32>}, {transform_indices = @transform_3, window_bounds = array<i64: 1, 8, 32>}]} {
    %c0 = arith.constant 0 : index
    %c0_0 = arith.constant 0 : index
    %c0_1 = arith.constant 0 : index
    %0 = vector.load %arg1[%c0, %c0_0, %c0_1] : memref<1x8x96xf32, #tpu.memory_space<vmem>>, vector<1x8x96xf32>
    %1 = vector.shape_cast %0 : vector<1x8x96xf32> to vector<8x96xf32>
    %c0_2 = arith.constant 0 : index
    %c0_3 = arith.constant 0 : index
    %c0_4 = arith.constant 0 : index
    %2 = vector.load %arg2[%c0_2, %c0_3, %c0_4] : memref<1x8x96xf32, #tpu.memory_space<vmem>>, vector<1x8x96xf32>
    %3 = vector.shape_cast %2 : vector<1x8x96xf32> to vector<8x96xf32>
    %4 = vector.extract_strided_slice %1 {offsets = [0, 0], sizes = [8, 8], strides = [1, 1]} : vector<8x96xf32> to vector<8x8xf32>
    %5 = vector.extract_strided_slice %3 {offsets = [0, 0], sizes = [8, 8], strides = [1, 1]} : vector<8x96xf32> to vector<8x8xf32>
    %6 = vector.extract_strided_slice %1 {offsets = [0, 32], sizes = [8, 8], strides = [1, 1]} : vector<8x96xf32> to vector<8x8xf32>
    %7 = vector.extract_strided_slice %3 {offsets = [0, 32], sizes = [8, 8], strides = [1, 1]} : vector<8x96xf32> to vector<8x8xf32>
    %8 = vector.extract_strided_slice %1 {offsets = [0, 64], sizes = [8, 8], strides = [1, 1]} : vector<8x96xf32> to vector<8x8xf32>
    %9 = vector.extract_strided_slice %3 {offsets = [0, 64], sizes = [8, 8], strides = [1, 1]} : vector<8x96xf32> to vector<8x8xf32>
    %10 = tpu.concatenate %4, %5 in 1 : vector<8x8xf32>, vector<8x8xf32> -> vector<8x16xf32>
    %11 = arith.truncf %10 : vector<8x16xf32> to vector<8x16xbf16>
    %12 = tpu.concatenate %6, %7 in 1 : vector<8x8xf32>, vector<8x8xf32> -> vector<8x16xf32>
    %13 = arith.truncf %12 : vector<8x16xf32> to vector<8x16xbf16>
    %cst = arith.constant dense<0.000000e+00> : vector<8x8xf32>
    %14 = tpu.matmul %11, %13, %cst {dimension_numbers = #tpu.dot_dimension_numbers<[1], [1], [0], [0], [0, 0, 1, 0], [], []>} : vector<8x16xbf16>, vector<8x16xbf16>, vector<8x8xf32> -> vector<8x8xf32>
    %cst_5 = arith.constant 0.353553385 : f32
    %15 = vector.broadcast %cst_5 : f32 to vector<8x8xf32>
    %16 = arith.mulf %14, %15 : vector<8x8xf32>
    %cst_6 = arith.constant dense<0xFF800000> : vector<8xf32>
    %17 = vector.multi_reduction <maximumf>, %16, %cst_6 [1] : vector<8x8xf32> to vector<8xf32>
    %18 = vector.shape_cast %17 : vector<8xf32> to vector<8x1xf32>
    %19 = vector.broadcast %18 : vector<8x1xf32> to vector<8x8xf32>
    %20 = arith.subf %16, %19 : vector<8x8xf32>
    %21 = math.exp %20 : vector<8x8xf32>
    %cst_7 = arith.constant dense<0.000000e+00> : vector<8xf32>
    %22 = vector.multi_reduction <add>, %21, %cst_7 [1] : vector<8x8xf32> to vector<8xf32>
    %23 = vector.shape_cast %22 : vector<8xf32> to vector<8x1xf32>
    %24 = tpu.reciprocal %23 {approx = true} : vector<8x1xf32> -> vector<8x1xf32>
    %25 = vector.broadcast %24 : vector<8x1xf32> to vector<8x8xf32>
    %26 = arith.mulf %21, %25 : vector<8x8xf32>
    %27 = arith.truncf %26 : vector<8x8xf32> to vector<8x8xbf16>
    %28 = arith.truncf %8 : vector<8x8xf32> to vector<8x8xbf16>
    %cst_8 = arith.constant dense<0.000000e+00> : vector<8x8xf32>
    %29 = tpu.matmul %27, %28, %cst_8 {dimension_numbers = #tpu.dot_dimension_numbers<[1], [0], [0], [1], [0, 0, 1, 1], [], []>} : vector<8x8xbf16>, vector<8x8xbf16>, vector<8x8xf32> -> vector<8x8xf32>
    %30 = arith.truncf %9 : vector<8x8xf32> to vector<8x8xbf16>
    %cst_9 = arith.constant dense<0.000000e+00> : vector<8x8xf32>
    %31 = tpu.matmul %27, %30, %cst_9 {dimension_numbers = #tpu.dot_dimension_numbers<[1], [0], [0], [1], [0, 0, 1, 1], [], []>} : vector<8x8xbf16>, vector<8x8xbf16>, vector<8x8xf32> -> vector<8x8xf32>
    %32 = vector.extract_strided_slice %1 {offsets = [0, 8], sizes = [8, 8], strides = [1, 1]} : vector<8x96xf32> to vector<8x8xf32>
    %33 = vector.extract_strided_slice %3 {offsets = [0, 8], sizes = [8, 8], strides = [1, 1]} : vector<8x96xf32> to vector<8x8xf32>
    %34 = vector.extract_strided_slice %1 {offsets = [0, 40], sizes = [8, 8], strides = [1, 1]} : vector<8x96xf32> to vector<8x8xf32>
    %35 = vector.extract_strided_slice %3 {offsets = [0, 40], sizes = [8, 8], strides = [1, 1]} : vector<8x96xf32> to vector<8x8xf32>
    %36 = vector.extract_strided_slice %1 {offsets = [0, 72], sizes = [8, 8], strides = [1, 1]} : vector<8x96xf32> to vector<8x8xf32>
    %37 = vector.extract_strided_slice %3 {offsets = [0, 72], sizes = [8, 8], strides = [1, 1]} : vector<8x96xf32> to vector<8x8xf32>
    %38 = tpu.concatenate %32, %33 in 1 : vector<8x8xf32>, vector<8x8xf32> -> vector<8x16xf32>
    %39 = arith.truncf %38 : vector<8x16xf32> to vector<8x16xbf16>
    %40 = tpu.concatenate %34, %35 in 1 : vector<8x8xf32>, vector<8x8xf32> -> vector<8x16xf32>
    %41 = arith.truncf %40 : vector<8x16xf32> to vector<8x16xbf16>
    %cst_10 = arith.constant dense<0.000000e+00> : vector<8x8xf32>
    %42 = tpu.matmul %39, %41, %cst_10 {dimension_numbers = #tpu.dot_dimension_numbers<[1], [1], [0], [0], [0, 0, 1, 0], [], []>} : vector<8x16xbf16>, vector<8x16xbf16>, vector<8x8xf32> -> vector<8x8xf32>
    %cst_11 = arith.constant 0.353553385 : f32
    %43 = vector.broadcast %cst_11 : f32 to vector<8x8xf32>
    %44 = arith.mulf %42, %43 : vector<8x8xf32>
    %cst_12 = arith.constant dense<0xFF800000> : vector<8xf32>
    %45 = vector.multi_reduction <maximumf>, %44, %cst_12 [1] : vector<8x8xf32> to vector<8xf32>
    %46 = vector.shape_cast %45 : vector<8xf32> to vector<8x1xf32>
    %47 = vector.broadcast %46 : vector<8x1xf32> to vector<8x8xf32>
    %48 = arith.subf %44, %47 : vector<8x8xf32>
    %49 = math.exp %48 : vector<8x8xf32>
    %cst_13 = arith.constant dense<0.000000e+00> : vector<8xf32>
    %50 = vector.multi_reduction <add>, %49, %cst_13 [1] : vector<8x8xf32> to vector<8xf32>
    %51 = vector.shape_cast %50 : vector<8xf32> to vector<8x1xf32>
    %52 = tpu.reciprocal %51 {approx = true} : vector<8x1xf32> -> vector<8x1xf32>
    %53 = vector.broadcast %52 : vector<8x1xf32> to vector<8x8xf32>
    %54 = arith.mulf %49, %53 : vector<8x8xf32>
    %55 = arith.truncf %54 : vector<8x8xf32> to vector<8x8xbf16>
    %56 = arith.truncf %36 : vector<8x8xf32> to vector<8x8xbf16>
    %cst_14 = arith.constant dense<0.000000e+00> : vector<8x8xf32>
    %57 = tpu.matmul %55, %56, %cst_14 {dimension_numbers = #tpu.dot_dimension_numbers<[1], [0], [0], [1], [0, 0, 1, 1], [], []>} : vector<8x8xbf16>, vector<8x8xbf16>, vector<8x8xf32> -> vector<8x8xf32>
    %58 = arith.truncf %37 : vector<8x8xf32> to vector<8x8xbf16>
    %cst_15 = arith.constant dense<0.000000e+00> : vector<8x8xf32>
    %59 = tpu.matmul %55, %58, %cst_15 {dimension_numbers = #tpu.dot_dimension_numbers<[1], [0], [0], [1], [0, 0, 1, 1], [], []>} : vector<8x8xbf16>, vector<8x8xbf16>, vector<8x8xf32> -> vector<8x8xf32>
    %60 = vector.extract_strided_slice %1 {offsets = [0, 16], sizes = [8, 8], strides = [1, 1]} : vector<8x96xf32> to vector<8x8xf32>
    %61 = vector.extract_strided_slice %3 {offsets = [0, 16], sizes = [8, 8], strides = [1, 1]} : vector<8x96xf32> to vector<8x8xf32>
    %62 = vector.extract_strided_slice %1 {offsets = [0, 48], sizes = [8, 8], strides = [1, 1]} : vector<8x96xf32> to vector<8x8xf32>
    %63 = vector.extract_strided_slice %3 {offsets = [0, 48], sizes = [8, 8], strides = [1, 1]} : vector<8x96xf32> to vector<8x8xf32>
    %64 = vector.extract_strided_slice %1 {offsets = [0, 80], sizes = [8, 8], strides = [1, 1]} : vector<8x96xf32> to vector<8x8xf32>
    %65 = vector.extract_strided_slice %3 {offsets = [0, 80], sizes = [8, 8], strides = [1, 1]} : vector<8x96xf32> to vector<8x8xf32>
    %66 = tpu.concatenate %60, %61 in 1 : vector<8x8xf32>, vector<8x8xf32> -> vector<8x16xf32>
    %67 = arith.truncf %66 : vector<8x16xf32> to vector<8x16xbf16>
    %68 = tpu.concatenate %62, %63 in 1 : vector<8x8xf32>, vector<8x8xf32> -> vector<8x16xf32>
    %69 = arith.truncf %68 : vector<8x16xf32> to vector<8x16xbf16>
    %cst_16 = arith.constant dense<0.000000e+00> : vector<8x8xf32>
    %70 = tpu.matmul %67, %69, %cst_16 {dimension_numbers = #tpu.dot_dimension_numbers<[1], [1], [0], [0], [0, 0, 1, 0], [], []>} : vector<8x16xbf16>, vector<8x16xbf16>, vector<8x8xf32> -> vector<8x8xf32>
    %cst_17 = arith.constant 0.353553385 : f32
    %71 = vector.broadcast %cst_17 : f32 to vector<8x8xf32>
    %72 = arith.mulf %70, %71 : vector<8x8xf32>
    %cst_18 = arith.constant dense<0xFF800000> : vector<8xf32>
    %73 = vector.multi_reduction <maximumf>, %72, %cst_18 [1] : vector<8x8xf32> to vector<8xf32>
    %74 = vector.shape_cast %73 : vector<8xf32> to vector<8x1xf32>
    %75 = vector.broadcast %74 : vector<8x1xf32> to vector<8x8xf32>
    %76 = arith.subf %72, %75 : vector<8x8xf32>
    %77 = math.exp %76 : vector<8x8xf32>
    %cst_19 = arith.constant dense<0.000000e+00> : vector<8xf32>
    %78 = vector.multi_reduction <add>, %77, %cst_19 [1] : vector<8x8xf32> to vector<8xf32>
    %79 = vector.shape_cast %78 : vector<8xf32> to vector<8x1xf32>
    %80 = tpu.reciprocal %79 {approx = true} : vector<8x1xf32> -> vector<8x1xf32>
    %81 = vector.broadcast %80 : vector<8x1xf32> to vector<8x8xf32>
    %82 = arith.mulf %77, %81 : vector<8x8xf32>
    %83 = arith.truncf %82 : vector<8x8xf32> to vector<8x8xbf16>
    %84 = arith.truncf %64 : vector<8x8xf32> to vector<8x8xbf16>
    %cst_20 = arith.constant dense<0.000000e+00> : vector<8x8xf32>
    %85 = tpu.matmul %83, %84, %cst_20 {dimension_numbers = #tpu.dot_dimension_numbers<[1], [0], [0], [1], [0, 0, 1, 1], [], []>} : vector<8x8xbf16>, vector<8x8xbf16>, vector<8x8xf32> -> vector<8x8xf32>
    %86 = arith.truncf %65 : vector<8x8xf32> to vector<8x8xbf16>
    %cst_21 = arith.constant dense<0.000000e+00> : vector<8x8xf32>
    %87 = tpu.matmul %83, %86, %cst_21 {dimension_numbers = #tpu.dot_dimension_numbers<[1], [0], [0], [1], [0, 0, 1, 1], [], []>} : vector<8x8xbf16>, vector<8x8xbf16>, vector<8x8xf32> -> vector<8x8xf32>
    %88 = vector.extract_strided_slice %1 {offsets = [0, 24], sizes = [8, 8], strides = [1, 1]} : vector<8x96xf32> to vector<8x8xf32>
    %89 = vector.extract_strided_slice %3 {offsets = [0, 24], sizes = [8, 8], strides = [1, 1]} : vector<8x96xf32> to vector<8x8xf32>
    %90 = vector.extract_strided_slice %1 {offsets = [0, 56], sizes = [8, 8], strides = [1, 1]} : vector<8x96xf32> to vector<8x8xf32>
    %91 = vector.extract_strided_slice %3 {offsets = [0, 56], sizes = [8, 8], strides = [1, 1]} : vector<8x96xf32> to vector<8x8xf32>
    %92 = vector.extract_strided_slice %1 {offsets = [0, 88], sizes = [8, 8], strides = [1, 1]} : vector<8x96xf32> to vector<8x8xf32>
    %93 = vector.extract_strided_slice %3 {offsets = [0, 88], sizes = [8, 8], strides = [1, 1]} : vector<8x96xf32> to vector<8x8xf32>
    %94 = tpu.concatenate %88, %89 in 1 : vector<8x8xf32>, vector<8x8xf32> -> vector<8x16xf32>
    %95 = arith.truncf %94 : vector<8x16xf32> to vector<8x16xbf16>
    %96 = tpu.concatenate %90, %91 in 1 : vector<8x8xf32>, vector<8x8xf32> -> vector<8x16xf32>
    %97 = arith.truncf %96 : vector<8x16xf32> to vector<8x16xbf16>
    %cst_22 = arith.constant dense<0.000000e+00> : vector<8x8xf32>
    %98 = tpu.matmul %95, %97, %cst_22 {dimension_numbers = #tpu.dot_dimension_numbers<[1], [1], [0], [0], [0, 0, 1, 0], [], []>} : vector<8x16xbf16>, vector<8x16xbf16>, vector<8x8xf32> -> vector<8x8xf32>
    %cst_23 = arith.constant 0.353553385 : f32
    %99 = vector.broadcast %cst_23 : f32 to vector<8x8xf32>
    %100 = arith.mulf %98, %99 : vector<8x8xf32>
    %cst_24 = arith.constant dense<0xFF800000> : vector<8xf32>
    %101 = vector.multi_reduction <maximumf>, %100, %cst_24 [1] : vector<8x8xf32> to vector<8xf32>
    %102 = vector.shape_cast %101 : vector<8xf32> to vector<8x1xf32>
    %103 = vector.broadcast %102 : vector<8x1xf32> to vector<8x8xf32>
    %104 = arith.subf %100, %103 : vector<8x8xf32>
    %105 = math.exp %104 : vector<8x8xf32>
    %cst_25 = arith.constant dense<0.000000e+00> : vector<8xf32>
    %106 = vector.multi_reduction <add>, %105, %cst_25 [1] : vector<8x8xf32> to vector<8xf32>
    %107 = vector.shape_cast %106 : vector<8xf32> to vector<8x1xf32>
    %108 = tpu.reciprocal %107 {approx = true} : vector<8x1xf32> -> vector<8x1xf32>
    %109 = vector.broadcast %108 : vector<8x1xf32> to vector<8x8xf32>
    %110 = arith.mulf %105, %109 : vector<8x8xf32>
    %111 = arith.truncf %110 : vector<8x8xf32> to vector<8x8xbf16>
    %112 = arith.truncf %92 : vector<8x8xf32> to vector<8x8xbf16>
    %cst_26 = arith.constant dense<0.000000e+00> : vector<8x8xf32>
    %113 = tpu.matmul %111, %112, %cst_26 {dimension_numbers = #tpu.dot_dimension_numbers<[1], [0], [0], [1], [0, 0, 1, 1], [], []>} : vector<8x8xbf16>, vector<8x8xbf16>, vector<8x8xf32> -> vector<8x8xf32>
    %114 = arith.truncf %93 : vector<8x8xf32> to vector<8x8xbf16>
    %cst_27 = arith.constant dense<0.000000e+00> : vector<8x8xf32>
    %115 = tpu.matmul %111, %114, %cst_27 {dimension_numbers = #tpu.dot_dimension_numbers<[1], [0], [0], [1], [0, 0, 1, 1], [], []>} : vector<8x8xbf16>, vector<8x8xbf16>, vector<8x8xf32> -> vector<8x8xf32>
    %116 = tpu.concatenate %29, %57, %85, %113 in 1 : vector<8x8xf32>, vector<8x8xf32>, vector<8x8xf32>, vector<8x8xf32> -> vector<8x32xf32>
    %c0_28 = arith.constant 0 : index
    %c0_29 = arith.constant 0 : index
    %c0_30 = arith.constant 0 : index
    %117 = vector.load %arg3[%c0_28, %c0_29, %c0_30] : memref<1x8x32xf32, #tpu.memory_space<vmem>>, vector<1x8x32xf32>
    %118 = vector.shape_cast %117 : vector<1x8x32xf32> to vector<8x32xf32>
    %119 = vector.shape_cast %116 : vector<8x32xf32> to vector<1x8x32xf32>
    tpu.vector_store %arg3[%c0_28, %c0_29, %c0_30], %119 {strides = array<i32>} : memref<1x8x32xf32, #tpu.memory_space<vmem>>, vector<1x8x32xf32>,
    %120 = tpu.concatenate %31, %59, %87, %115 in 1 : vector<8x8xf32>, vector<8x8xf32>, vector<8x8xf32>, vector<8x8xf32> -> vector<8x32xf32>
    %c0_31 = arith.constant 0 : index
    %c0_32 = arith.constant 0 : index
    %c0_33 = arith.constant 0 : index
    %121 = vector.load %arg4[%c0_31, %c0_32, %c0_33] : memref<1x8x32xf32, #tpu.memory_space<vmem>>, vector<1x8x32xf32>
    %122 = vector.shape_cast %121 : vector<1x8x32xf32> to vector<8x32xf32>
    %123 = vector.shape_cast %120 : vector<8x32xf32> to vector<1x8x32xf32>
    tpu.vector_store %arg4[%c0_31, %c0_32, %c0_33], %123 {strides = array<i32>} : memref<1x8x32xf32, #tpu.memory_space<vmem>>, vector<1x8x32xf32>,
    return
  }
  func.func @transform_0(%arg0: i32) -> (i32, i32, i32) {
    %c0_i32 = arith.constant 0 : i32
    %c0_i32_0 = arith.constant 0 : i32
    %c0_i32_1 = arith.constant 0 : i32
    return %arg0, %c0_i32, %c0_i32_0 : i32, i32, i32
  }
  func.func @transform_1(%arg0: i32) -> (i32, i32, i32) {
    %c0_i32 = arith.constant 0 : i32
    %c0_i32_0 = arith.constant 0 : i32
    %c0_i32_1 = arith.constant 0 : i32
    return %arg0, %c0_i32, %c0_i32_0 : i32, i32, i32
  }
  func.func @transform_2(%arg0: i32) -> (i32, i32, i32) {
    %c0_i32 = arith.constant 0 : i32
    %c0_i32_0 = arith.constant 0 : i32
    %c0_i32_1 = arith.constant 0 : i32
    return %arg0, %c0_i32, %c0_i32_0 : i32, i32, i32
  }
  func.func @transform_3(%arg0: i32) -> (i32, i32, i32) {
    %c0_i32 = arith.constant 0 : i32
    %c0_i32_0 = arith.constant 0 : i32
    %c0_i32_1 = arith.constant 0 : i32
    return %arg0, %c0_i32, %c0_i32_0 : i32, i32, i32
  }
}

module attributes {stable_mosaic.version = 11 : i64} {
  func.func @_oproj_addnorm_kernel(%arg0: i32, %arg1: memref<16x32xf32, #tpu.memory_space<vmem>>, %arg2: memref<16x32xf32, #tpu.memory_space<vmem>>, %arg3: memref<16x32xf32, #tpu.memory_space<vmem>>, %arg4: memref<16x32xf32, #tpu.memory_space<vmem>>, %arg5: memref<32x32xbf16, #tpu.memory_space<vmem>>, %arg6: memref<32x32xbf16, #tpu.memory_space<vmem>>, %arg7: memref<32x32xbf16, #tpu.memory_space<vmem>>, %arg8: memref<1x32xf32, #tpu.memory_space<vmem>>, %arg9: memref<1x32xf32, #tpu.memory_space<vmem>>, %arg10: memref<1x32xf32, #tpu.memory_space<vmem>>, %arg11: memref<1x32xf32, #tpu.memory_space<vmem>>, %arg12: memref<1x32xf32, #tpu.memory_space<vmem>>, %arg13: memref<1x32xf32, #tpu.memory_space<vmem>>, %arg14: memref<16x32xf32, #tpu.memory_space<vmem>>, %arg15: memref<16x32xf32, #tpu.memory_space<vmem>>) attributes {dimension_semantics = [#tpu.dimension_semantics<parallel>], iteration_bounds = array<i64: 1>, scalar_prefetch = 0 : i64, scratch_operands = 0 : i64, tpu.core_type = #tpu.core_type<tc>, window_params = [{transform_indices = @transform_0, window_bounds = array<i64: 16, 32>}, {transform_indices = @transform_1, window_bounds = array<i64: 16, 32>}, {transform_indices = @transform_2, window_bounds = array<i64: 16, 32>}, {transform_indices = @transform_3, window_bounds = array<i64: 16, 32>}, {pipeline_mode = #tpu.pipeline_mode<synchronous>, transform_indices = @transform_4, window_bounds = array<i64: 32, 32>}, {pipeline_mode = #tpu.pipeline_mode<synchronous>, transform_indices = @transform_5, window_bounds = array<i64: 32, 32>}, {pipeline_mode = #tpu.pipeline_mode<synchronous>, transform_indices = @transform_6, window_bounds = array<i64: 32, 32>}, {pipeline_mode = #tpu.pipeline_mode<synchronous>, transform_indices = @transform_7, window_bounds = array<i64: 1, 32>}, {pipeline_mode = #tpu.pipeline_mode<synchronous>, transform_indices = @transform_8, window_bounds = array<i64: 1, 32>}, {pipeline_mode = #tpu.pipeline_mode<synchronous>, transform_indices = @transform_9, window_bounds = array<i64: 1, 32>}, {pipeline_mode = #tpu.pipeline_mode<synchronous>, transform_indices = @transform_10, window_bounds = array<i64: 1, 32>}, {pipeline_mode = #tpu.pipeline_mode<synchronous>, transform_indices = @transform_11, window_bounds = array<i64: 1, 32>}, {pipeline_mode = #tpu.pipeline_mode<synchronous>, transform_indices = @transform_12, window_bounds = array<i64: 1, 32>}, {transform_indices = @transform_13, window_bounds = array<i64: 16, 32>}, {transform_indices = @transform_14, window_bounds = array<i64: 16, 32>}]} {
    %c0 = arith.constant 0 : index
    %c0_0 = arith.constant 0 : index
    %0 = vector.load %arg1[%c0, %c0_0] : memref<16x32xf32, #tpu.memory_space<vmem>>, vector<16x32xf32>
    %c0_1 = arith.constant 0 : index
    %c0_2 = arith.constant 0 : index
    %1 = vector.load %arg2[%c0_1, %c0_2] : memref<16x32xf32, #tpu.memory_space<vmem>>, vector<16x32xf32>
    %2 = arith.addf %0, %1 : vector<16x32xf32>
    %3 = arith.truncf %2 : vector<16x32xf32> to vector<16x32xbf16>
    %4 = arith.truncf %0 : vector<16x32xf32> to vector<16x32xbf16>
    %c0_3 = arith.constant 0 : index
    %c0_4 = arith.constant 0 : index
    %5 = vector.load %arg5[%c0_3, %c0_4] : memref<32x32xbf16, #tpu.memory_space<vmem>>, vector<32x32xbf16>
    %cst = arith.constant dense<0.000000e+00> : vector<16x32xf32>
    %6 = tpu.matmul %4, %5, %cst {dimension_numbers = #tpu.dot_dimension_numbers<[1], [0], [0], [1], [0, 0, 1, 1], [], []>} : vector<16x32xbf16>, vector<32x32xbf16>, vector<16x32xf32> -> vector<16x32xf32>
    %7 = arith.truncf %1 : vector<16x32xf32> to vector<16x32xbf16>
    %c0_5 = arith.constant 0 : index
    %c0_6 = arith.constant 0 : index
    %8 = vector.load %arg6[%c0_5, %c0_6] : memref<32x32xbf16, #tpu.memory_space<vmem>>, vector<32x32xbf16>
    %cst_7 = arith.constant dense<0.000000e+00> : vector<16x32xf32>
    %9 = tpu.matmul %7, %8, %cst_7 {dimension_numbers = #tpu.dot_dimension_numbers<[1], [0], [0], [1], [0, 0, 1, 1], [], []>} : vector<16x32xbf16>, vector<32x32xbf16>, vector<16x32xf32> -> vector<16x32xf32>
    %c0_8 = arith.constant 0 : index
    %c0_9 = arith.constant 0 : index
    %10 = vector.load %arg7[%c0_8, %c0_9] : memref<32x32xbf16, #tpu.memory_space<vmem>>, vector<32x32xbf16>
    %cst_10 = arith.constant dense<0.000000e+00> : vector<16x32xf32>
    %11 = tpu.matmul %3, %10, %cst_10 {dimension_numbers = #tpu.dot_dimension_numbers<[1], [0], [0], [1], [0, 0, 1, 1], [], []>} : vector<16x32xbf16>, vector<32x32xbf16>, vector<16x32xf32> -> vector<16x32xf32>
    %12 = arith.subf %6, %9 : vector<16x32xf32>
    %c0_11 = arith.constant 0 : index
    %c0_12 = arith.constant 0 : index
    %13 = vector.load %arg8[%c0_11, %c0_12] : memref<1x32xf32, #tpu.memory_space<vmem>>, vector<1x32xf32>
    %14 = vector.broadcast %13 : vector<1x32xf32> to vector<16x32xf32>
    %15 = arith.addf %12, %14 : vector<16x32xf32>
    %16 = arith.subf %11, %6 : vector<16x32xf32>
    %17 = arith.subf %16, %9 : vector<16x32xf32>
    %c0_13 = arith.constant 0 : index
    %c0_14 = arith.constant 0 : index
    %18 = vector.load %arg9[%c0_13, %c0_14] : memref<1x32xf32, #tpu.memory_space<vmem>>, vector<1x32xf32>
    %19 = vector.broadcast %18 : vector<1x32xf32> to vector<16x32xf32>
    %20 = arith.addf %17, %19 : vector<16x32xf32>
    %c0_15 = arith.constant 0 : index
    %c0_16 = arith.constant 0 : index
    %21 = vector.load %arg3[%c0_15, %c0_16] : memref<16x32xf32, #tpu.memory_space<vmem>>, vector<16x32xf32>
    %22 = arith.addf %21, %15 : vector<16x32xf32>
    %c0_17 = arith.constant 0 : index
    %c0_18 = arith.constant 0 : index
    %23 = vector.load %arg4[%c0_17, %c0_18] : memref<16x32xf32, #tpu.memory_space<vmem>>, vector<16x32xf32>
    %24 = arith.addf %23, %20 : vector<16x32xf32>
    %c0_19 = arith.constant 0 : index
    %c0_20 = arith.constant 0 : index
    %25 = vector.load %arg10[%c0_19, %c0_20] : memref<1x32xf32, #tpu.memory_space<vmem>>, vector<1x32xf32>
    %c0_21 = arith.constant 0 : index
    %c0_22 = arith.constant 0 : index
    %26 = vector.load %arg11[%c0_21, %c0_22] : memref<1x32xf32, #tpu.memory_space<vmem>>, vector<1x32xf32>
    %cst_23 = arith.constant dense<0.000000e+00> : vector<16xf32>
    %27 = vector.multi_reduction <add>, %22, %cst_23 [1] : vector<16x32xf32> to vector<16xf32>
    %28 = vector.shape_cast %27 : vector<16xf32> to vector<16x1xf32>
    %cst_24 = arith.constant 3.200000e+01 : f32
    %29 = vector.broadcast %cst_24 : f32 to vector<16x1xf32>
    %30 = arith.divf %28, %29 : vector<16x1xf32>
    %31 = vector.broadcast %30 : vector<16x1xf32> to vector<16x32xf32>
    %32 = arith.subf %22, %31 : vector<16x32xf32>
    %33 = arith.mulf %32, %32 : vector<16x32xf32>
    %cst_25 = arith.constant dense<0.000000e+00> : vector<16xf32>
    %34 = vector.multi_reduction <add>, %33, %cst_25 [1] : vector<16x32xf32> to vector<16xf32>
    %35 = vector.shape_cast %34 : vector<16xf32> to vector<16x1xf32>
    %cst_26 = arith.constant 3.200000e+01 : f32
    %36 = vector.broadcast %cst_26 : f32 to vector<16x1xf32>
    %37 = arith.divf %35, %36 : vector<16x1xf32>
    %cst_27 = arith.constant 9.99999974E-6 : f32
    %38 = vector.broadcast %cst_27 : f32 to vector<16x1xf32>
    %39 = arith.addf %37, %38 : vector<16x1xf32>
    %40 = math.rsqrt %39 : vector<16x1xf32>
    %41 = vector.broadcast %40 : vector<16x1xf32> to vector<16x32xf32>
    %42 = arith.mulf %32, %41 : vector<16x32xf32>
    %43 = vector.broadcast %25 : vector<1x32xf32> to vector<16x32xf32>
    %44 = arith.mulf %42, %43 : vector<16x32xf32>
    %45 = vector.broadcast %26 : vector<1x32xf32> to vector<16x32xf32>
    %46 = arith.addf %44, %45 : vector<16x32xf32>
    %c0_28 = arith.constant 0 : index
    %c0_29 = arith.constant 0 : index
    %47 = vector.load %arg14[%c0_28, %c0_29] : memref<16x32xf32, #tpu.memory_space<vmem>>, vector<16x32xf32>
    tpu.vector_store %arg14[%c0_28, %c0_29], %46 {strides = array<i32>} : memref<16x32xf32, #tpu.memory_space<vmem>>, vector<16x32xf32>,
    %c0_30 = arith.constant 0 : index
    %c0_31 = arith.constant 0 : index
    %48 = vector.load %arg12[%c0_30, %c0_31] : memref<1x32xf32, #tpu.memory_space<vmem>>, vector<1x32xf32>
    %c0_32 = arith.constant 0 : index
    %c0_33 = arith.constant 0 : index
    %49 = vector.load %arg13[%c0_32, %c0_33] : memref<1x32xf32, #tpu.memory_space<vmem>>, vector<1x32xf32>
    %cst_34 = arith.constant dense<0.000000e+00> : vector<16xf32>
    %50 = vector.multi_reduction <add>, %24, %cst_34 [1] : vector<16x32xf32> to vector<16xf32>
    %51 = vector.shape_cast %50 : vector<16xf32> to vector<16x1xf32>
    %cst_35 = arith.constant 3.200000e+01 : f32
    %52 = vector.broadcast %cst_35 : f32 to vector<16x1xf32>
    %53 = arith.divf %51, %52 : vector<16x1xf32>
    %54 = vector.broadcast %53 : vector<16x1xf32> to vector<16x32xf32>
    %55 = arith.subf %24, %54 : vector<16x32xf32>
    %56 = arith.mulf %55, %55 : vector<16x32xf32>
    %cst_36 = arith.constant dense<0.000000e+00> : vector<16xf32>
    %57 = vector.multi_reduction <add>, %56, %cst_36 [1] : vector<16x32xf32> to vector<16xf32>
    %58 = vector.shape_cast %57 : vector<16xf32> to vector<16x1xf32>
    %cst_37 = arith.constant 3.200000e+01 : f32
    %59 = vector.broadcast %cst_37 : f32 to vector<16x1xf32>
    %60 = arith.divf %58, %59 : vector<16x1xf32>
    %cst_38 = arith.constant 9.99999974E-6 : f32
    %61 = vector.broadcast %cst_38 : f32 to vector<16x1xf32>
    %62 = arith.addf %60, %61 : vector<16x1xf32>
    %63 = math.rsqrt %62 : vector<16x1xf32>
    %64 = vector.broadcast %63 : vector<16x1xf32> to vector<16x32xf32>
    %65 = arith.mulf %55, %64 : vector<16x32xf32>
    %66 = vector.broadcast %48 : vector<1x32xf32> to vector<16x32xf32>
    %67 = arith.mulf %65, %66 : vector<16x32xf32>
    %68 = vector.broadcast %49 : vector<1x32xf32> to vector<16x32xf32>
    %69 = arith.addf %67, %68 : vector<16x32xf32>
    %c0_39 = arith.constant 0 : index
    %c0_40 = arith.constant 0 : index
    %70 = vector.load %arg15[%c0_39, %c0_40] : memref<16x32xf32, #tpu.memory_space<vmem>>, vector<16x32xf32>
    tpu.vector_store %arg15[%c0_39, %c0_40], %69 {strides = array<i32>} : memref<16x32xf32, #tpu.memory_space<vmem>>, vector<16x32xf32>,
    return
  }
  func.func @transform_0(%arg0: i32) -> (i32, i32) {
    %c0_i32 = arith.constant 0 : i32
    %c0_i32_0 = arith.constant 0 : i32
    return %arg0, %c0_i32 : i32, i32
  }
  func.func @transform_1(%arg0: i32) -> (i32, i32) {
    %c0_i32 = arith.constant 0 : i32
    %c0_i32_0 = arith.constant 0 : i32
    return %arg0, %c0_i32 : i32, i32
  }
  func.func @transform_2(%arg0: i32) -> (i32, i32) {
    %c0_i32 = arith.constant 0 : i32
    %c0_i32_0 = arith.constant 0 : i32
    return %arg0, %c0_i32 : i32, i32
  }
  func.func @transform_3(%arg0: i32) -> (i32, i32) {
    %c0_i32 = arith.constant 0 : i32
    %c0_i32_0 = arith.constant 0 : i32
    return %arg0, %c0_i32 : i32, i32
  }
  func.func @transform_4(%arg0: i32) -> (i32, i32) {
    %c0_i32 = arith.constant 0 : i32
    %c0_i32_0 = arith.constant 0 : i32
    %c0_i32_1 = arith.constant 0 : i32
    return %c0_i32, %c0_i32_0 : i32, i32
  }
  func.func @transform_5(%arg0: i32) -> (i32, i32) {
    %c0_i32 = arith.constant 0 : i32
    %c0_i32_0 = arith.constant 0 : i32
    %c0_i32_1 = arith.constant 0 : i32
    return %c0_i32, %c0_i32_0 : i32, i32
  }
  func.func @transform_6(%arg0: i32) -> (i32, i32) {
    %c0_i32 = arith.constant 0 : i32
    %c0_i32_0 = arith.constant 0 : i32
    %c0_i32_1 = arith.constant 0 : i32
    return %c0_i32, %c0_i32_0 : i32, i32
  }
  func.func @transform_7(%arg0: i32) -> (i32, i32) {
    %c0_i32 = arith.constant 0 : i32
    %c0_i32_0 = arith.constant 0 : i32
    %c0_i32_1 = arith.constant 0 : i32
    return %c0_i32, %c0_i32_0 : i32, i32
  }
  func.func @transform_8(%arg0: i32) -> (i32, i32) {
    %c0_i32 = arith.constant 0 : i32
    %c0_i32_0 = arith.constant 0 : i32
    %c0_i32_1 = arith.constant 0 : i32
    return %c0_i32, %c0_i32_0 : i32, i32
  }
  func.func @transform_9(%arg0: i32) -> (i32, i32) {
    %c0_i32 = arith.constant 0 : i32
    %c0_i32_0 = arith.constant 0 : i32
    %c0_i32_1 = arith.constant 0 : i32
    return %c0_i32, %c0_i32_0 : i32, i32
  }
  func.func @transform_10(%arg0: i32) -> (i32, i32) {
    %c0_i32 = arith.constant 0 : i32
    %c0_i32_0 = arith.constant 0 : i32
    %c0_i32_1 = arith.constant 0 : i32
    return %c0_i32, %c0_i32_0 : i32, i32
  }
  func.func @transform_11(%arg0: i32) -> (i32, i32) {
    %c0_i32 = arith.constant 0 : i32
    %c0_i32_0 = arith.constant 0 : i32
    %c0_i32_1 = arith.constant 0 : i32
    return %c0_i32, %c0_i32_0 : i32, i32
  }
  func.func @transform_12(%arg0: i32) -> (i32, i32) {
    %c0_i32 = arith.constant 0 : i32
    %c0_i32_0 = arith.constant 0 : i32
    %c0_i32_1 = arith.constant 0 : i32
    return %c0_i32, %c0_i32_0 : i32, i32
  }
  func.func @transform_13(%arg0: i32) -> (i32, i32) {
    %c0_i32 = arith.constant 0 : i32
    %c0_i32_0 = arith.constant 0 : i32
    return %arg0, %c0_i32 : i32, i32
  }
  func.func @transform_14(%arg0: i32) -> (i32, i32) {
    %c0_i32 = arith.constant 0 : i32
    %c0_i32_0 = arith.constant 0 : i32
    return %arg0, %c0_i32 : i32, i32
  }
}

module attributes {stable_mosaic.version = 11 : i64} {
  func.func @_ffn_addnorm_kernel(%arg0: i32, %arg1: memref<16x32xf32, #tpu.memory_space<vmem>>, %arg2: memref<16x32xf32, #tpu.memory_space<vmem>>, %arg3: memref<32x64xbf16, #tpu.memory_space<vmem>>, %arg4: memref<32x64xbf16, #tpu.memory_space<vmem>>, %arg5: memref<32x64xbf16, #tpu.memory_space<vmem>>, %arg6: memref<1x64xf32, #tpu.memory_space<vmem>>, %arg7: memref<1x64xf32, #tpu.memory_space<vmem>>, %arg8: memref<64x32xbf16, #tpu.memory_space<vmem>>, %arg9: memref<64x32xbf16, #tpu.memory_space<vmem>>, %arg10: memref<64x32xbf16, #tpu.memory_space<vmem>>, %arg11: memref<1x32xf32, #tpu.memory_space<vmem>>, %arg12: memref<1x32xf32, #tpu.memory_space<vmem>>, %arg13: memref<1x32xf32, #tpu.memory_space<vmem>>, %arg14: memref<1x32xf32, #tpu.memory_space<vmem>>, %arg15: memref<1x32xf32, #tpu.memory_space<vmem>>, %arg16: memref<1x32xf32, #tpu.memory_space<vmem>>, %arg17: memref<16x32xf32, #tpu.memory_space<vmem>>, %arg18: memref<16x32xf32, #tpu.memory_space<vmem>>) attributes {dimension_semantics = [#tpu.dimension_semantics<parallel>], iteration_bounds = array<i64: 1>, scalar_prefetch = 0 : i64, scratch_operands = 0 : i64, tpu.core_type = #tpu.core_type<tc>, window_params = [{transform_indices = @transform_0, window_bounds = array<i64: 16, 32>}, {transform_indices = @transform_1, window_bounds = array<i64: 16, 32>}, {pipeline_mode = #tpu.pipeline_mode<synchronous>, transform_indices = @transform_2, window_bounds = array<i64: 32, 64>}, {pipeline_mode = #tpu.pipeline_mode<synchronous>, transform_indices = @transform_3, window_bounds = array<i64: 32, 64>}, {pipeline_mode = #tpu.pipeline_mode<synchronous>, transform_indices = @transform_4, window_bounds = array<i64: 32, 64>}, {pipeline_mode = #tpu.pipeline_mode<synchronous>, transform_indices = @transform_5, window_bounds = array<i64: 1, 64>}, {pipeline_mode = #tpu.pipeline_mode<synchronous>, transform_indices = @transform_6, window_bounds = array<i64: 1, 64>}, {pipeline_mode = #tpu.pipeline_mode<synchronous>, transform_indices = @transform_7, window_bounds = array<i64: 64, 32>}, {pipeline_mode = #tpu.pipeline_mode<synchronous>, transform_indices = @transform_8, window_bounds = array<i64: 64, 32>}, {pipeline_mode = #tpu.pipeline_mode<synchronous>, transform_indices = @transform_9, window_bounds = array<i64: 64, 32>}, {pipeline_mode = #tpu.pipeline_mode<synchronous>, transform_indices = @transform_10, window_bounds = array<i64: 1, 32>}, {pipeline_mode = #tpu.pipeline_mode<synchronous>, transform_indices = @transform_11, window_bounds = array<i64: 1, 32>}, {pipeline_mode = #tpu.pipeline_mode<synchronous>, transform_indices = @transform_12, window_bounds = array<i64: 1, 32>}, {pipeline_mode = #tpu.pipeline_mode<synchronous>, transform_indices = @transform_13, window_bounds = array<i64: 1, 32>}, {pipeline_mode = #tpu.pipeline_mode<synchronous>, transform_indices = @transform_14, window_bounds = array<i64: 1, 32>}, {pipeline_mode = #tpu.pipeline_mode<synchronous>, transform_indices = @transform_15, window_bounds = array<i64: 1, 32>}, {transform_indices = @transform_16, window_bounds = array<i64: 16, 32>}, {transform_indices = @transform_17, window_bounds = array<i64: 16, 32>}]} {
    %c0 = arith.constant 0 : index
    %c0_0 = arith.constant 0 : index
    %0 = vector.load %arg1[%c0, %c0_0] : memref<16x32xf32, #tpu.memory_space<vmem>>, vector<16x32xf32>
    %c0_1 = arith.constant 0 : index
    %c0_2 = arith.constant 0 : index
    %1 = vector.load %arg2[%c0_1, %c0_2] : memref<16x32xf32, #tpu.memory_space<vmem>>, vector<16x32xf32>
    %2 = arith.addf %0, %1 : vector<16x32xf32>
    %3 = arith.truncf %2 : vector<16x32xf32> to vector<16x32xbf16>
    %4 = arith.truncf %0 : vector<16x32xf32> to vector<16x32xbf16>
    %c0_3 = arith.constant 0 : index
    %c0_4 = arith.constant 0 : index
    %5 = vector.load %arg3[%c0_3, %c0_4] : memref<32x64xbf16, #tpu.memory_space<vmem>>, vector<32x64xbf16>
    %cst = arith.constant dense<0.000000e+00> : vector<16x64xf32>
    %6 = tpu.matmul %4, %5, %cst {dimension_numbers = #tpu.dot_dimension_numbers<[1], [0], [0], [1], [0, 0, 1, 1], [], []>} : vector<16x32xbf16>, vector<32x64xbf16>, vector<16x64xf32> -> vector<16x64xf32>
    %7 = arith.truncf %1 : vector<16x32xf32> to vector<16x32xbf16>
    %c0_5 = arith.constant 0 : index
    %c0_6 = arith.constant 0 : index
    %8 = vector.load %arg4[%c0_5, %c0_6] : memref<32x64xbf16, #tpu.memory_space<vmem>>, vector<32x64xbf16>
    %cst_7 = arith.constant dense<0.000000e+00> : vector<16x64xf32>
    %9 = tpu.matmul %7, %8, %cst_7 {dimension_numbers = #tpu.dot_dimension_numbers<[1], [0], [0], [1], [0, 0, 1, 1], [], []>} : vector<16x32xbf16>, vector<32x64xbf16>, vector<16x64xf32> -> vector<16x64xf32>
    %c0_8 = arith.constant 0 : index
    %c0_9 = arith.constant 0 : index
    %10 = vector.load %arg5[%c0_8, %c0_9] : memref<32x64xbf16, #tpu.memory_space<vmem>>, vector<32x64xbf16>
    %cst_10 = arith.constant dense<0.000000e+00> : vector<16x64xf32>
    %11 = tpu.matmul %3, %10, %cst_10 {dimension_numbers = #tpu.dot_dimension_numbers<[1], [0], [0], [1], [0, 0, 1, 1], [], []>} : vector<16x32xbf16>, vector<32x64xbf16>, vector<16x64xf32> -> vector<16x64xf32>
    %12 = arith.subf %6, %9 : vector<16x64xf32>
    %c0_11 = arith.constant 0 : index
    %c0_12 = arith.constant 0 : index
    %13 = vector.load %arg6[%c0_11, %c0_12] : memref<1x64xf32, #tpu.memory_space<vmem>>, vector<1x64xf32>
    %14 = vector.broadcast %13 : vector<1x64xf32> to vector<16x64xf32>
    %15 = arith.addf %12, %14 : vector<16x64xf32>
    %cst_13 = arith.constant 0.000000e+00 : f32
    %16 = vector.broadcast %cst_13 : f32 to vector<16x64xf32>
    %17 = arith.maximumf %15, %16 : vector<16x64xf32>
    %18 = arith.subf %11, %6 : vector<16x64xf32>
    %19 = arith.subf %18, %9 : vector<16x64xf32>
    %c0_14 = arith.constant 0 : index
    %c0_15 = arith.constant 0 : index
    %20 = vector.load %arg7[%c0_14, %c0_15] : memref<1x64xf32, #tpu.memory_space<vmem>>, vector<1x64xf32>
    %21 = vector.broadcast %20 : vector<1x64xf32> to vector<16x64xf32>
    %22 = arith.addf %19, %21 : vector<16x64xf32>
    %cst_16 = arith.constant 0.000000e+00 : f32
    %23 = vector.broadcast %cst_16 : f32 to vector<16x64xf32>
    %24 = arith.maximumf %22, %23 : vector<16x64xf32>
    %25 = arith.addf %17, %24 : vector<16x64xf32>
    %26 = arith.truncf %25 : vector<16x64xf32> to vector<16x64xbf16>
    %27 = arith.truncf %17 : vector<16x64xf32> to vector<16x64xbf16>
    %c0_17 = arith.constant 0 : index
    %c0_18 = arith.constant 0 : index
    %28 = vector.load %arg8[%c0_17, %c0_18] : memref<64x32xbf16, #tpu.memory_space<vmem>>, vector<64x32xbf16>
    %cst_19 = arith.constant dense<0.000000e+00> : vector<16x32xf32>
    %29 = tpu.matmul %27, %28, %cst_19 {dimension_numbers = #tpu.dot_dimension_numbers<[1], [0], [0], [1], [0, 0, 1, 1], [], []>} : vector<16x64xbf16>, vector<64x32xbf16>, vector<16x32xf32> -> vector<16x32xf32>
    %30 = arith.truncf %24 : vector<16x64xf32> to vector<16x64xbf16>
    %c0_20 = arith.constant 0 : index
    %c0_21 = arith.constant 0 : index
    %31 = vector.load %arg9[%c0_20, %c0_21] : memref<64x32xbf16, #tpu.memory_space<vmem>>, vector<64x32xbf16>
    %cst_22 = arith.constant dense<0.000000e+00> : vector<16x32xf32>
    %32 = tpu.matmul %30, %31, %cst_22 {dimension_numbers = #tpu.dot_dimension_numbers<[1], [0], [0], [1], [0, 0, 1, 1], [], []>} : vector<16x64xbf16>, vector<64x32xbf16>, vector<16x32xf32> -> vector<16x32xf32>
    %c0_23 = arith.constant 0 : index
    %c0_24 = arith.constant 0 : index
    %33 = vector.load %arg10[%c0_23, %c0_24] : memref<64x32xbf16, #tpu.memory_space<vmem>>, vector<64x32xbf16>
    %cst_25 = arith.constant dense<0.000000e+00> : vector<16x32xf32>
    %34 = tpu.matmul %26, %33, %cst_25 {dimension_numbers = #tpu.dot_dimension_numbers<[1], [0], [0], [1], [0, 0, 1, 1], [], []>} : vector<16x64xbf16>, vector<64x32xbf16>, vector<16x32xf32> -> vector<16x32xf32>
    %35 = arith.subf %29, %32 : vector<16x32xf32>
    %c0_26 = arith.constant 0 : index
    %c0_27 = arith.constant 0 : index
    %36 = vector.load %arg11[%c0_26, %c0_27] : memref<1x32xf32, #tpu.memory_space<vmem>>, vector<1x32xf32>
    %37 = vector.broadcast %36 : vector<1x32xf32> to vector<16x32xf32>
    %38 = arith.addf %35, %37 : vector<16x32xf32>
    %39 = arith.subf %34, %29 : vector<16x32xf32>
    %40 = arith.subf %39, %32 : vector<16x32xf32>
    %c0_28 = arith.constant 0 : index
    %c0_29 = arith.constant 0 : index
    %41 = vector.load %arg12[%c0_28, %c0_29] : memref<1x32xf32, #tpu.memory_space<vmem>>, vector<1x32xf32>
    %42 = vector.broadcast %41 : vector<1x32xf32> to vector<16x32xf32>
    %43 = arith.addf %40, %42 : vector<16x32xf32>
    %44 = arith.addf %0, %38 : vector<16x32xf32>
    %45 = arith.addf %1, %43 : vector<16x32xf32>
    %c0_30 = arith.constant 0 : index
    %c0_31 = arith.constant 0 : index
    %46 = vector.load %arg13[%c0_30, %c0_31] : memref<1x32xf32, #tpu.memory_space<vmem>>, vector<1x32xf32>
    %c0_32 = arith.constant 0 : index
    %c0_33 = arith.constant 0 : index
    %47 = vector.load %arg14[%c0_32, %c0_33] : memref<1x32xf32, #tpu.memory_space<vmem>>, vector<1x32xf32>
    %cst_34 = arith.constant dense<0.000000e+00> : vector<16xf32>
    %48 = vector.multi_reduction <add>, %44, %cst_34 [1] : vector<16x32xf32> to vector<16xf32>
    %49 = vector.shape_cast %48 : vector<16xf32> to vector<16x1xf32>
    %cst_35 = arith.constant 3.200000e+01 : f32
    %50 = vector.broadcast %cst_35 : f32 to vector<16x1xf32>
    %51 = arith.divf %49, %50 : vector<16x1xf32>
    %52 = vector.broadcast %51 : vector<16x1xf32> to vector<16x32xf32>
    %53 = arith.subf %44, %52 : vector<16x32xf32>
    %54 = arith.mulf %53, %53 : vector<16x32xf32>
    %cst_36 = arith.constant dense<0.000000e+00> : vector<16xf32>
    %55 = vector.multi_reduction <add>, %54, %cst_36 [1] : vector<16x32xf32> to vector<16xf32>
    %56 = vector.shape_cast %55 : vector<16xf32> to vector<16x1xf32>
    %cst_37 = arith.constant 3.200000e+01 : f32
    %57 = vector.broadcast %cst_37 : f32 to vector<16x1xf32>
    %58 = arith.divf %56, %57 : vector<16x1xf32>
    %cst_38 = arith.constant 9.99999974E-6 : f32
    %59 = vector.broadcast %cst_38 : f32 to vector<16x1xf32>
    %60 = arith.addf %58, %59 : vector<16x1xf32>
    %61 = math.rsqrt %60 : vector<16x1xf32>
    %62 = vector.broadcast %61 : vector<16x1xf32> to vector<16x32xf32>
    %63 = arith.mulf %53, %62 : vector<16x32xf32>
    %64 = vector.broadcast %46 : vector<1x32xf32> to vector<16x32xf32>
    %65 = arith.mulf %63, %64 : vector<16x32xf32>
    %66 = vector.broadcast %47 : vector<1x32xf32> to vector<16x32xf32>
    %67 = arith.addf %65, %66 : vector<16x32xf32>
    %c0_39 = arith.constant 0 : index
    %c0_40 = arith.constant 0 : index
    %68 = vector.load %arg17[%c0_39, %c0_40] : memref<16x32xf32, #tpu.memory_space<vmem>>, vector<16x32xf32>
    tpu.vector_store %arg17[%c0_39, %c0_40], %67 {strides = array<i32>} : memref<16x32xf32, #tpu.memory_space<vmem>>, vector<16x32xf32>,
    %c0_41 = arith.constant 0 : index
    %c0_42 = arith.constant 0 : index
    %69 = vector.load %arg15[%c0_41, %c0_42] : memref<1x32xf32, #tpu.memory_space<vmem>>, vector<1x32xf32>
    %c0_43 = arith.constant 0 : index
    %c0_44 = arith.constant 0 : index
    %70 = vector.load %arg16[%c0_43, %c0_44] : memref<1x32xf32, #tpu.memory_space<vmem>>, vector<1x32xf32>
    %cst_45 = arith.constant dense<0.000000e+00> : vector<16xf32>
    %71 = vector.multi_reduction <add>, %45, %cst_45 [1] : vector<16x32xf32> to vector<16xf32>
    %72 = vector.shape_cast %71 : vector<16xf32> to vector<16x1xf32>
    %cst_46 = arith.constant 3.200000e+01 : f32
    %73 = vector.broadcast %cst_46 : f32 to vector<16x1xf32>
    %74 = arith.divf %72, %73 : vector<16x1xf32>
    %75 = vector.broadcast %74 : vector<16x1xf32> to vector<16x32xf32>
    %76 = arith.subf %45, %75 : vector<16x32xf32>
    %77 = arith.mulf %76, %76 : vector<16x32xf32>
    %cst_47 = arith.constant dense<0.000000e+00> : vector<16xf32>
    %78 = vector.multi_reduction <add>, %77, %cst_47 [1] : vector<16x32xf32> to vector<16xf32>
    %79 = vector.shape_cast %78 : vector<16xf32> to vector<16x1xf32>
    %cst_48 = arith.constant 3.200000e+01 : f32
    %80 = vector.broadcast %cst_48 : f32 to vector<16x1xf32>
    %81 = arith.divf %79, %80 : vector<16x1xf32>
    %cst_49 = arith.constant 9.99999974E-6 : f32
    %82 = vector.broadcast %cst_49 : f32 to vector<16x1xf32>
    %83 = arith.addf %81, %82 : vector<16x1xf32>
    %84 = math.rsqrt %83 : vector<16x1xf32>
    %85 = vector.broadcast %84 : vector<16x1xf32> to vector<16x32xf32>
    %86 = arith.mulf %76, %85 : vector<16x32xf32>
    %87 = vector.broadcast %69 : vector<1x32xf32> to vector<16x32xf32>
    %88 = arith.mulf %86, %87 : vector<16x32xf32>
    %89 = vector.broadcast %70 : vector<1x32xf32> to vector<16x32xf32>
    %90 = arith.addf %88, %89 : vector<16x32xf32>
    %c0_50 = arith.constant 0 : index
    %c0_51 = arith.constant 0 : index
    %91 = vector.load %arg18[%c0_50, %c0_51] : memref<16x32xf32, #tpu.memory_space<vmem>>, vector<16x32xf32>
    tpu.vector_store %arg18[%c0_50, %c0_51], %90 {strides = array<i32>} : memref<16x32xf32, #tpu.memory_space<vmem>>, vector<16x32xf32>,
    return
  }
  func.func @transform_0(%arg0: i32) -> (i32, i32) {
    %c0_i32 = arith.constant 0 : i32
    %c0_i32_0 = arith.constant 0 : i32
    return %arg0, %c0_i32 : i32, i32
  }
  func.func @transform_1(%arg0: i32) -> (i32, i32) {
    %c0_i32 = arith.constant 0 : i32
    %c0_i32_0 = arith.constant 0 : i32
    return %arg0, %c0_i32 : i32, i32
  }
  func.func @transform_2(%arg0: i32) -> (i32, i32) {
    %c0_i32 = arith.constant 0 : i32
    %c0_i32_0 = arith.constant 0 : i32
    %c0_i32_1 = arith.constant 0 : i32
    return %c0_i32, %c0_i32_0 : i32, i32
  }
  func.func @transform_3(%arg0: i32) -> (i32, i32) {
    %c0_i32 = arith.constant 0 : i32
    %c0_i32_0 = arith.constant 0 : i32
    %c0_i32_1 = arith.constant 0 : i32
    return %c0_i32, %c0_i32_0 : i32, i32
  }
  func.func @transform_4(%arg0: i32) -> (i32, i32) {
    %c0_i32 = arith.constant 0 : i32
    %c0_i32_0 = arith.constant 0 : i32
    %c0_i32_1 = arith.constant 0 : i32
    return %c0_i32, %c0_i32_0 : i32, i32
  }
  func.func @transform_5(%arg0: i32) -> (i32, i32) {
    %c0_i32 = arith.constant 0 : i32
    %c0_i32_0 = arith.constant 0 : i32
    %c0_i32_1 = arith.constant 0 : i32
    return %c0_i32, %c0_i32_0 : i32, i32
  }
  func.func @transform_6(%arg0: i32) -> (i32, i32) {
    %c0_i32 = arith.constant 0 : i32
    %c0_i32_0 = arith.constant 0 : i32
    %c0_i32_1 = arith.constant 0 : i32
    return %c0_i32, %c0_i32_0 : i32, i32
  }
  func.func @transform_7(%arg0: i32) -> (i32, i32) {
    %c0_i32 = arith.constant 0 : i32
    %c0_i32_0 = arith.constant 0 : i32
    %c0_i32_1 = arith.constant 0 : i32
    return %c0_i32, %c0_i32_0 : i32, i32
  }
  func.func @transform_8(%arg0: i32) -> (i32, i32) {
    %c0_i32 = arith.constant 0 : i32
    %c0_i32_0 = arith.constant 0 : i32
    %c0_i32_1 = arith.constant 0 : i32
    return %c0_i32, %c0_i32_0 : i32, i32
  }
  func.func @transform_9(%arg0: i32) -> (i32, i32) {
    %c0_i32 = arith.constant 0 : i32
    %c0_i32_0 = arith.constant 0 : i32
    %c0_i32_1 = arith.constant 0 : i32
    return %c0_i32, %c0_i32_0 : i32, i32
  }
  func.func @transform_10(%arg0: i32) -> (i32, i32) {
    %c0_i32 = arith.constant 0 : i32
    %c0_i32_0 = arith.constant 0 : i32
    %c0_i32_1 = arith.constant 0 : i32
    return %c0_i32, %c0_i32_0 : i32, i32
  }
  func.func @transform_11(%arg0: i32) -> (i32, i32) {
    %c0_i32 = arith.constant 0 : i32
    %c0_i32_0 = arith.constant 0 : i32
    %c0_i32_1 = arith.constant 0 : i32
    return %c0_i32, %c0_i32_0 : i32, i32
  }
  func.func @transform_12(%arg0: i32) -> (i32, i32) {
    %c0_i32 = arith.constant 0 : i32
    %c0_i32_0 = arith.constant 0 : i32
    %c0_i32_1 = arith.constant 0 : i32
    return %c0_i32, %c0_i32_0 : i32, i32
  }
  func.func @transform_13(%arg0: i32) -> (i32, i32) {
    %c0_i32 = arith.constant 0 : i32
    %c0_i32_0 = arith.constant 0 : i32
    %c0_i32_1 = arith.constant 0 : i32
    return %c0_i32, %c0_i32_0 : i32, i32
  }
  func.func @transform_14(%arg0: i32) -> (i32, i32) {
    %c0_i32 = arith.constant 0 : i32
    %c0_i32_0 = arith.constant 0 : i32
    %c0_i32_1 = arith.constant 0 : i32
    return %c0_i32, %c0_i32_0 : i32, i32
  }
  func.func @transform_15(%arg0: i32) -> (i32, i32) {
    %c0_i32 = arith.constant 0 : i32
    %c0_i32_0 = arith.constant 0 : i32
    %c0_i32_1 = arith.constant 0 : i32
    return %c0_i32, %c0_i32_0 : i32, i32
  }
  func.func @transform_16(%arg0: i32) -> (i32, i32) {
    %c0_i32 = arith.constant 0 : i32
    %c0_i32_0 = arith.constant 0 : i32
    return %arg0, %c0_i32 : i32, i32
  }
  func.func @transform_17(%arg0: i32) -> (i32, i32) {
    %c0_i32 = arith.constant 0 : i32
    %c0_i32_0 = arith.constant 0 : i32
    return %arg0, %c0_i32 : i32, i32
  }
}

</mosaic_0001>

<llo_original>
// kernel: encoder_block_forward.4
$region0: #{encoder_block_forward.4}
  #allocation0 [shape = 'u32[]', space=smem, size = 0x4, offset = 0x4, fixed_abs, tag = 'smem constant byte address 0x4 - core index']
  #allocation1 [shape = 'u32[72,128]{1,0:T(1,128)}', space=vmem, size = 0x9000, scoped, tag = 'internal scratch']
  %s0 = inlined_call_operand.vmem [shape: f32[16,32], index: 0, kind: input, shape index: {}]
  %s1 = inlined_call_operand.vmem [shape: f32[16,32], index: 1, kind: input, shape index: {}]
  %s2 = inlined_call_operand.vmem [shape: bf16[32,96], index: 2, kind: input, shape index: {}]
  %s3 = inlined_call_operand.vmem [shape: bf16[32,96], index: 3, kind: input, shape index: {}]
  %s4 = inlined_call_operand.vmem [shape: bf16[32,96], index: 4, kind: input, shape index: {}]
  %s5 = inlined_call_operand.vmem [shape: f32[1,96], index: 5, kind: input, shape index: {}]
  %s6 = inlined_call_operand.vmem [shape: f32[1,96], index: 6, kind: input, shape index: {}]
  %s7 = inlined_call_operand.vmem [shape: f32[16,96], index: 7, kind: output, shape index: {0}]
  %s8 = inlined_call_operand.vmem [shape: f32[16,96], index: 8, kind: output, shape index: {1}]
  %9 = xla_tuple %s7, %s8
  %s10 = sld [smem:[#allocation0]]
  $region46: #{encoder_block_forward.4} parent=0
    _
  %s12 = ssub.s32 1, %s10
  %s13 = scalar_select 0, %s12, %s10
  // Predicated region
  $region2: #{encoder_block_forward.4} parent=0 // pred_check
    _
  $region3: #{encoder_block_forward.4} parent=0 // pred_check_branch
    %15 = sbr.rel (0) target = $region5
  $region4: #{encoder_block_forward.4} parent=0 // pred_region
    _
  $region5: #{encoder_block_forward.4} parent=0 // pred_fallthru
    _
  // Predicated region
  $region6: #{encoder_block_forward.4} parent=0 // pred_check
    _
  $region7: #{encoder_block_forward.4} parent=0 // pred_check_branch
    %17 = sbr.rel (0) target = $region9
  $region8: #{encoder_block_forward.4} parent=0 // pred_region
    _
  $region9: #{encoder_block_forward.4} parent=0 // pred_fallthru
    _
  // Predicated region
  $region10: #{encoder_block_forward.4} parent=0 // pred_check
    _
  $region11: #{encoder_block_forward.4} parent=0 // pred_check_branch
    %19 = sbr.rel (0) target = $region13
  $region12: #{encoder_block_forward.4} parent=0 // pred_region
    _
  $region13: #{encoder_block_forward.4} parent=0 // pred_fallthru
    _
  // Predicated region
  $region14: #{encoder_block_forward.4} parent=0 // pred_check
    _
  $region15: #{encoder_block_forward.4} parent=0 // pred_check_branch
    %21 = sbr.rel (0) target = $region17
  $region16: #{encoder_block_forward.4} parent=0 // pred_region
    _
  $region17: #{encoder_block_forward.4} parent=0 // pred_fallthru
    _
  // Predicated region
  $region18: #{encoder_block_forward.4} parent=0 // pred_check
    _
  $region19: #{encoder_block_forward.4} parent=0 // pred_check_branch
    %23 = sbr.rel (0) target = $region21
  $region20: #{encoder_block_forward.4} parent=0 // pred_region
    _
  $region21: #{encoder_block_forward.4} parent=0 // pred_fallthru
    _
  // Predicated region
  $region22: #{encoder_block_forward.4} parent=0 // pred_check
    _
  $region23: #{encoder_block_forward.4} parent=0 // pred_check_branch
    %25 = sbr.rel (0) target = $region25
  $region24: #{encoder_block_forward.4} parent=0 // pred_region
    _
  $region25: #{encoder_block_forward.4} parent=0 // pred_fallthru
    _
  // Predicated region
  $region26: #{encoder_block_forward.4} parent=0 // pred_check
    _
  $region27: #{encoder_block_forward.4} parent=0 // pred_check_branch
    %27 = sbr.rel (0) target = $region29
  $region28: #{encoder_block_forward.4} parent=0 // pred_region
    _
  $region29: #{encoder_block_forward.4} parent=0 // pred_fallthru
    _
  %v29 = vld [vmem:[%s0] sm:$0xff]
  %v30 = vld [vmem:[%s0 + $0x8] sm:$0xff]
  %v31 = vld [vmem:[%s1] sm:$0xff]
  %v32 = vld [vmem:[%s1 + $0x8] sm:$0xff]
  %v33 = vadd.f32 %v29, %v31
  %v34 = vadd.f32 %v30, %v32
  %v35 = vpack.c.bf16 %v34, %v33
  %v36 = vpack.c.bf16 %v30, %v29
  %v37 = vld [vmem:[%s2] sm:$0xf]
  %v38 = vld [vmem:[%s2 + $0x4] sm:$0xf]
  %v39 = vld [vmem:[%s2 + $0x8] sm:$0xf]
  %v40 = vld [vmem:[%s2 + $0xc] sm:$0xf]
  %v45 = vunpack.c.l.b16 %v37
  %v46 = vunpack.c.l.b16 %v38
  %v47 = vunpack.c.l.b16 %v39
  %v48 = vunpack.c.l.b16 %v40
  %v49 = vpack.c.b16 %v46, %v45
  %v50 = vpack.c.b16 %v48, %v47
  %vm53 = vcmask 261120
  %v55 = vsel %vm53, %v36, 0
  %57 = vmatpush.bf16.msra.mxu0 0
  %58 = vmatpush.bf16.msra.mxu0 0
  %59 = vmatpush.bf16.msra.mxu0 0
  %60 = vmatpush.bf16.msra.mxu0 0
  %61 = vmatpush.bf16.msra.mxu0 0
  %62 = vmatpush.bf16.msra.mxu0 0
  %63 = vmatpush.bf16.msra.mxu0 %v50
  %64 = vmatpush.bf16.msra.mxu0 %v49
  %65 = vmatmul.bf16.gmra.mxu0 %v55
  %v66 = vpop.f32.mrf.mxu0
  %v67 = vadd.f32 0.0, %v66
  %v68 = vpop.f32.mrf.mxu0
  %v69 = vadd.f32 0.0, %v68
  %70 = vdwg.mxu0
  %v71 = vpack.c.bf16 %v32, %v31
  %v72 = vld [vmem:[%s3] sm:$0xf]
  %v73 = vld [vmem:[%s3 + $0x4] sm:$0xf]
  %v74 = vld [vmem:[%s3 + $0x8] sm:$0xf]
  %v75 = vld [vmem:[%s3 + $0xc] sm:$0xf]
  %v80 = vunpack.c.l.b16 %v72
  %v81 = vunpack.c.l.b16 %v73
  %v82 = vunpack.c.l.b16 %v74
  %v83 = vunpack.c.l.b16 %v75
  %v84 = vpack.c.b16 %v81, %v80
  %v85 = vpack.c.b16 %v83, %v82
  %v89 = vsel %vm53, %v71, 0
  %91 = vmatpush.bf16.msra.mxu0 0
  %92 = vmatpush.bf16.msra.mxu0 0
  %93 = vmatpush.bf16.msra.mxu0 0
  %94 = vmatpush.bf16.msra.mxu0 0
  %95 = vmatpush.bf16.msra.mxu0 0
  %96 = vmatpush.bf16.msra.mxu0 0
  %97 = vmatpush.bf16.msra.mxu0 %v85
  %98 = vmatpush.bf16.msra.mxu0 %v84
  %99 = vmatmul.bf16.gmra.mxu0 %v89
  %v100 = vpop.f32.mrf.mxu0
  %v101 = vadd.f32 0.0, %v100
  %v102 = vpop.f32.mrf.mxu0
  %v103 = vadd.f32 0.0, %v102
  %104 = vdwg.mxu0
  %v105 = vld [vmem:[%s4] sm:$0xf]
  %v106 = vld [vmem:[%s4 + $0x4] sm:$0xf]
  %v107 = vld [vmem:[%s4 + $0x8] sm:$0xf]
  %v108 = vld [vmem:[%s4 + $0xc] sm:$0xf]
  %v113 = vunpack.c.l.b16 %v105
  %v114 = vunpack.c.l.b16 %v106
  %v115 = vunpack.c.l.b16 %v107
  %v116 = vunpack.c.l.b16 %v108
  %v117 = vpack.c.b16 %v114, %v113
  %v118 = vpack.c.b16 %v116, %v115
  %v122 = vsel %vm53, %v35, 0
  %124 = vmatpush.bf16.msra.mxu0 0
  %125 = vmatpush.bf16.msra.mxu0 0
  %126 = vmatpush.bf16.msra.mxu0 0
  %127 = vmatpush.bf16.msra.mxu0 0
  %128 = vmatpush.bf16.msra.mxu0 0
  %129 = vmatpush.bf16.msra.mxu0 0
  %130 = vmatpush.bf16.msra.mxu0 %v118
  %131 = vmatpush.bf16.msra.mxu0 %v117
  %132 = vmatmul.bf16.gmra.mxu0 %v122
  %v133 = vpop.f32.mrf.mxu0
  %v134 = vadd.f32 0.0, %v133
  %v135 = vpop.f32.mrf.mxu0
  %v136 = vadd.f32 0.0, %v135
  %137 = vdwg.mxu0
  %v138 = vsub.f32 %v67, %v101
  %v139 = vsub.f32 %v69, %v103
  %v140 = vld [vmem:[%s5] sm:$0x1]
  %v142 = vperm.slane %v140, 0
  %v144 = vadd.f32 %v138, %v142
  %v145 = vadd.f32 %v139, %v142
  %vm146 = vcmask 785408
  %147 = vst.msk [vmem:[%s7] sm:$0xff] %vm146, %v144
  %148 = vst.msk [vmem:[%s7 + $0x8] sm:$0xff] %vm146, %v145
  %v149 = vsub.f32 %v134, %v67
  %v150 = vsub.f32 %v136, %v69
  %v151 = vsub.f32 %v149, %v101
  %v152 = vsub.f32 %v150, %v103
  %v153 = vld [vmem:[%s6] sm:$0x1]
  %v155 = vperm.slane %v153, 0
  %v157 = vadd.f32 %v151, %v155
  %v158 = vadd.f32 %v152, %v155
  %159 = vst.msk [vmem:[%s8] sm:$0xff] %vm146, %v157
  %160 = vst.msk [vmem:[%s8 + $0x8] sm:$0xff] %vm146, %v158
  // Predicated region
  $region30: #{encoder_block_forward.4} parent=0 // pred_check
    _
  $region31: #{encoder_block_forward.4} parent=0 // pred_check_branch
    %162 = sbr.rel (0) target = $region33
  $region32: #{encoder_block_forward.4} parent=0 // pred_region
    _
  $region33: #{encoder_block_forward.4} parent=0 // pred_fallthru
    _
  // Predicated region
  $region34: #{encoder_block_forward.4} parent=0 // pred_check
    _
  $region35: #{encoder_block_forward.4} parent=0 // pred_check_branch
    %164 = sbr.rel (0) target = $region37
  $region36: #{encoder_block_forward.4} parent=0 // pred_region
    _
  $region37: #{encoder_block_forward.4} parent=0 // pred_fallthru
    _
  // Predicated region
  $region38: #{encoder_block_forward.4} parent=0 // pred_check
    _
  $region39: #{encoder_block_forward.4} parent=0 // pred_check_branch
    %166 = sbr.rel (0) target = $region41
  $region40: #{encoder_block_forward.4} parent=0 // pred_region
    _
  $region41: #{encoder_block_forward.4} parent=0 // pred_fallthru
    _
  // Predicated region
  $region42: #{encoder_block_forward.4} parent=0 // pred_check
    _
  $region43: #{encoder_block_forward.4} parent=0 // pred_check_branch
    %168 = sbr.rel (0) target = $region45
  $region44: #{encoder_block_forward.4} parent=0 // pred_region
    _
  $region45: #{encoder_block_forward.4} parent=0 // pred_fallthru
    _

// kernel: encoder_block_forward.5
$region0: #{encoder_block_forward.5}
  #allocation0 [shape = 'u32[]', space=smem, size = 0x4, offset = 0x4, fixed_abs, tag = 'smem constant byte address 0x4 - core index']
  #allocation1 [shape = 'u32[72,128]{1,0:T(1,128)}', space=vmem, size = 0x9000, scoped, tag = 'internal scratch']
  %s0 = inlined_call_operand.vmem [shape: f32[2,8,96], index: 0, kind: input, shape index: {}]
  %s1 = inlined_call_operand.vmem [shape: f32[2,8,96], index: 1, kind: input, shape index: {}]
  %s2 = inlined_call_operand.vmem [shape: f32[2,8,32], index: 2, kind: output, shape index: {0}]
  %s3 = inlined_call_operand.vmem [shape: f32[2,8,32], index: 3, kind: output, shape index: {1}]
  %4 = xla_tuple %s2, %s3
  %s5 = sld [smem:[#allocation0]]
  $region49: #{encoder_block_forward.5} parent=0
    _
  %s7 = ssub.s32 1, %s5
  %s8 = scalar_select 0, %s7, %s5
  loop: start=0, step=1, limit=4
  $region2: #{encoder_block_forward.5} parent=0 // loop_pre_header
    _
  $region3: #{encoder_block_forward.5} parent=0 // loop_header
    %s10 = sphi 0, %s14
    %p11 = scmp.ge.s32.totalorder %s10, 4
    %s20 = sphi 0, %s22
    %s23 = sphi 0, %s20
    %s24 = sphi 0, %s23
    %s40 = sphi 0, %s24
    %s46 = sphi 0, %s48
    %s49 = sphi 0, %s46
    %s50 = sphi 0, %s49
    %s66 = sphi 0, %s50
    %s72 = sphi 0, %s74
    %s75 = sphi 0, %s72
    %s76 = sphi 0, %s75
    %s92 = sphi 0, %s76
    %s98 = sphi 0, %s100
    %s101 = sphi 0, %s98
    %s102 = sphi 0, %s101
    %s118 = sphi 0, %s102
  $region4: #{encoder_block_forward.5} parent=0 // loop_header_branch
    %13 = sbr.rel (%p11) target = $region8
  $region5: #{encoder_block_forward.5} parent=0 // loop_body
    %s15 = ssub.s32 %s10, 1
    %s16 = ssub.s32 %s10, 2
    %s17 = sadd.s32 %s10, 1
    %s18 = ssub.s32 %s10, %s17
    %p19 = scmp.eq.s32.totalorder %s18, 0
    %s21 = sadd.s32 %s20, 1
    %s22 = scalar_select %p19, %s20, %s21
    %p25 = pneg %p19
    %p26 = scmp.eq.s32.totalorder %s10, 1
    %p27 = por %p25, %p26
    %p28 = scmp.ne.s32.totalorder %s20, %s23
    %p29 = scmp.eq.s32.totalorder %s10, 0
    %p30 = por %p28, %p29
    %p31 = scmp.ne.s32.totalorder %s20, %s23
    %p32 = scmp.eq.s32.totalorder %s15, 1
    %p33 = por %p31, %p32
    %p34 = scmp.ne.s32.totalorder %s23, %s24
    %p35 = scmp.eq.s32.totalorder %s15, 0
    %p36 = por %p34, %p35
    %p37 = scmp.ne.s32.totalorder %s23, %s24
    %p38 = scmp.eq.s32.totalorder %s16, 1
    %p39 = por %p37, %p38
    %p41 = scmp.ne.s32.totalorder %s24, %s40
    %p42 = scmp.eq.s32.totalorder %s16, 0
    %p43 = por %p41, %p42
    %s44 = ssub.s32 %s10, %s17
    %p45 = scmp.eq.s32.totalorder %s44, 0
    %s47 = sadd.s32 %s46, 1
    %s48 = scalar_select %p45, %s46, %s47
    %p51 = pneg %p45
    %p52 = scmp.eq.s32.totalorder %s10, 1
    %p53 = por %p51, %p52
    %p54 = scmp.ne.s32.totalorder %s46, %s49
    %p55 = scmp.eq.s32.totalorder %s10, 0
    %p56 = por %p54, %p55
    %p57 = scmp.ne.s32.totalorder %s46, %s49
    %p58 = scmp.eq.s32.totalorder %s15, 1
    %p59 = por %p57, %p58
    %p60 = scmp.ne.s32.totalorder %s49, %s50
    %p61 = scmp.eq.s32.totalorder %s15, 0
    %p62 = por %p60, %p61
    %p63 = scmp.ne.s32.totalorder %s49, %s50
    %p64 = scmp.eq.s32.totalorder %s16, 1
    %p65 = por %p63, %p64
    %p67 = scmp.ne.s32.totalorder %s50, %s66
    %p68 = scmp.eq.s32.totalorder %s16, 0
    %p69 = por %p67, %p68
    %s70 = ssub.s32 %s10, %s17
    %p71 = scmp.eq.s32.totalorder %s70, 0
    %s73 = sadd.s32 %s72, 1
    %s74 = scalar_select %p71, %s72, %s73
    %p77 = pneg %p71
    %p78 = scmp.eq.s32.totalorder %s10, 1
    %p79 = por %p77, %p78
    %p80 = scmp.ne.s32.totalorder %s72, %s75
    %p81 = scmp.eq.s32.totalorder %s10, 0
    %p82 = por %p80, %p81
    %p83 = scmp.ne.s32.totalorder %s72, %s75
    %p84 = scmp.eq.s32.totalorder %s15, 1
    %p85 = por %p83, %p84
    %p86 = scmp.ne.s32.totalorder %s75, %s76
    %p87 = scmp.eq.s32.totalorder %s15, 0
    %p88 = por %p86, %p87
    %p89 = scmp.ne.s32.totalorder %s75, %s76
    %p90 = scmp.eq.s32.totalorder %s16, 1
    %p91 = por %p89, %p90
    %p93 = scmp.ne.s32.totalorder %s76, %s92
    %p94 = scmp.eq.s32.totalorder %s16, 0
    %p95 = por %p93, %p94
    %s96 = ssub.s32 %s10, %s17
    %p97 = scmp.eq.s32.totalorder %s96, 0
    %s99 = sadd.s32 %s98, 1
    %s100 = scalar_select %p97, %s98, %s99
    %p103 = pneg %p97
    %p104 = scmp.eq.s32.totalorder %s10, 1
    %p105 = por %p103, %p104
    %p106 = scmp.ne.s32.totalorder %s98, %s101
    %p107 = scmp.eq.s32.totalorder %s10, 0
    %p108 = por %p106, %p107
    %p109 = scmp.ne.s32.totalorder %s98, %s101
    %p110 = scmp.eq.s32.totalorder %s15, 1
    %p111 = por %p109, %p110
    %p112 = scmp.ne.s32.totalorder %s101, %s102
    %p113 = scmp.eq.s32.totalorder %s15, 0
    %p114 = por %p112, %p113
    %p115 = scmp.ne.s32.totalorder %s101, %s102
    %p116 = scmp.eq.s32.totalorder %s16, 1
    %p117 = por %p115, %p116
    %p119 = scmp.ne.s32.totalorder %s102, %s118
    %p120 = scmp.eq.s32.totalorder %s16, 0
    %p121 = por %p119, %p120
    %p122 = scmp.le.s32.totalorder 1, %s10
    %p123 = scmp.lt.s32.totalorder %s10, 3
    %p124 = pnand %p122, %p123
    %p125 = pneg %p124
    // Predicated region
    $region9: #{encoder_block_forward.5} parent=5 // pred_check
      _
    $region10: #{encoder_block_forward.5} parent=5 // pred_check_branch
      %127 = sbr.rel (%p124) target = $region12
    $region11: #{encoder_block_forward.5} parent=5 // pred_region
      %s128 = ssub.s32 %s10, 1
    $region12: #{encoder_block_forward.5} parent=5 // pred_fallthru
      _
    %p129 = scmp.lt.s32.totalorder %s10, 2
    // Predicated region
    $region13: #{encoder_block_forward.5} parent=5 // pred_check
      %p130 = pneg %p129
    $region14: #{encoder_block_forward.5} parent=5 // pred_check_branch
      %132 = sbr.rel (%p130) target = $region16
    $region15: #{encoder_block_forward.5} parent=5 // pred_region
      // Predicated region
      $region17: #{encoder_block_forward.5} parent=15 // pred_check
        %p133 = pneg %p30
      $region18: #{encoder_block_forward.5} parent=15 // pred_check_branch
        %135 = sbr.rel (%p133) target = $region20
      $region19: #{encoder_block_forward.5} parent=15 // pred_region
        %p136 = scmp.lt.s32.totalorder %s10, 1
        %s137 = scalar_select %p136, %s10, 1
        %s138 = smul.addr %s137, 8
        %s139 = scalar_lea.vmem %s0, %s138
      $region20: #{encoder_block_forward.5} parent=15 // pred_fallthru
        _
      // Predicated region
      $region21: #{encoder_block_forward.5} parent=15 // pred_check
        %p140 = pneg %p56
      $region22: #{encoder_block_forward.5} parent=15 // pred_check_branch
        %142 = sbr.rel (%p140) target = $region24
      $region23: #{encoder_block_forward.5} parent=15 // pred_region
        %p143 = scmp.lt.s32.totalorder %s10, 1
        %s144 = scalar_select %p143, %s10, 1
        %s145 = smul.addr %s144, 8
        %s146 = scalar_lea.vmem %s1, %s145
      $region24: #{encoder_block_forward.5} parent=15 // pred_fallthru
        _
    $region16: #{encoder_block_forward.5} parent=5 // pred_fallthru
      _
    %p147 = scmp.le.s32.totalorder 1, %s10
    %p148 = scmp.lt.s32.totalorder %s10, 3
    %p149 = pnand %p147, %p148
    %p150 = pneg %p149
    // Predicated region
    $region25: #{encoder_block_forward.5} parent=5 // pred_check
      _
    $region26: #{encoder_block_forward.5} parent=5 // pred_check_branch
      %152 = sbr.rel (%p149) target = $region28
    $region27: #{encoder_block_forward.5} parent=5 // pred_region
      %s153 = ssub.s32 %s10, 1
      %p154 = scmp.lt.s32.totalorder %s15, 1
      %s155 = scalar_select %p154, %s15, 1
      %s156 = smul.addr %s155, 8
      %s157 = scalar_lea.vmem %s0, %s156
      %p158 = pneg %p36
      %p159 = pneg %p33
      %p160 = scmp.lt.s32.totalorder %s15, 1
      %s161 = scalar_select %p160, %s15, 1
      %s162 = smul.addr %s161, 8
      %s163 = scalar_lea.vmem %s1, %s162
      %p164 = pneg %p62
      %p165 = pneg %p59
      %p166 = pneg %p88
      %p167 = pneg %p85
      %p168 = scmp.lt.s32.totalorder %s15, 1
      %s169 = scalar_select %p168, %s15, 1
      %s170 = smul.addr %s169, 8
      %s171 = scalar_lea.vmem %s2, %s170
      %p172 = pneg %p114
      %p173 = pneg %p111
      %p174 = scmp.lt.s32.totalorder %s15, 1
      %s175 = scalar_select %p174, %s15, 1
      %s176 = smul.addr %s175, 8
      %s177 = scalar_lea.vmem %s3, %s176
      %p178 = scmp.lt.s32.totalorder %s15, 1
      %s179 = scalar_select %p178, %s15, 1
      %s180 = smul.addr %s179, 8
      %s181 = scalar_lea.vmem %s0, %s180
      %p182 = scmp.lt.s32.totalorder %s15, 1
      %s183 = scalar_select %p182, %s15, 1
      %s184 = smul.addr %s183, 8
      %s185 = scalar_lea.vmem %s1, %s184
      %p186 = scmp.lt.s32.totalorder %s15, 1
      %s187 = scalar_select %p186, %s15, 1
      %s188 = smul.addr %s187, 8
      %s189 = scalar_lea.vmem %s2, %s188
      %p190 = scmp.lt.s32.totalorder %s15, 1
      %s191 = scalar_select %p190, %s15, 1
      %s192 = smul.addr %s191, 8
      %s193 = scalar_lea.vmem %s3, %s192
      %v195 = vld [vmem:[%s181] sm:$0xff]
      %v196 = vld [vmem:[%s185] sm:$0xff]
      %198 = vrot.lane.b32.xlu0 %v196, 8
      %v199 = vpop.permute.xlu0 %198
      %vm201 = vcmask 64512
      %v202 = vsel %vm201, %v195, %v199
      %v203 = vpack.c.bf16 %v202, %v202
      %205 = vrot.lane.b32.xlu0 %v195, 96
      %v206 = vpop.permute.xlu0 %205
      %208 = vrot.lane.b32.xlu0 %v196, 104
      %v209 = vpop.permute.xlu0 %208
      %v211 = vsel %vm201, %v206, %v209
      %v212 = vpack.c.bf16 %v211, %v211
      %vm213 = vcmask 130048
      %v215 = vsel %vm213, %v203, 0
      %v218 = vsel %vm213, %v212, 0
      %220 = vmatpush.bf16.xpose.msra.mxu0 0
      %221 = vmatpush.bf16.xpose.msra.mxu0 0
      %222 = vmatpush.bf16.xpose.msra.mxu0 0
      %223 = vmatpush.bf16.xpose.msra.mxu0 0
      %224 = vmatpush.bf16.xpose.msra.mxu0 0
      %225 = vmatpush.bf16.xpose.msra.mxu0 0
      %226 = vmatpush.bf16.xpose.msra.mxu0 0
      %227 = vmatpush.bf16.xpose.msra.mxu0 %v218
      %228 = vmatmul.bf16.gmra.mxu0 %v215
      %v229 = vpop.f32.mrf.mxu0
      %v230 = vadd.f32 0.0, %v229
      %v231 = vpop.f32.mrf.mxu0
      %232 = vdwg.mxu0
      %v233 = vmul.f32 %v230, 0.35355338
      %v234 = vsel %vm201, %v233, -inf
      %235 = vmax.xlane.f32.xlu0 %v234
      %v236 = vpop.xlane.xlu0 %235
      %v237 = vsub.f32 %v233, %v236
      %v238 = vmul.f32 %v237, 1.442695
      %v239 = vpow.pop %v238
      %v240 = vsel %vm201, %v239, 0.0
      %241 = vadd.xlane.f32.xlu0 %v240
      %v242 = vpop.xlane.xlu0 %241
      %v243 = vrcp.pop %v242
      %v244 = vmul.f32 %v239, %v243
      %v245 = vpack.c.bf16 %v244, %v244
      %v246 = vpack.c.bf16 %v195, %v195
      %248 = vrot.lane.b32.xlu0 %v246, 64
      %v249 = vpop.permute.xlu0 %248
      %v251 = vsel %vm201, %v245, 0
      %vm253 = vcmask 1043456
      %v255 = vsel %vm253, %v249, 0
      %257 = vmatpush.bf16.msra.mxu0 0
      %258 = vmatpush.bf16.msra.mxu0 0
      %259 = vmatpush.bf16.msra.mxu0 0
      %260 = vmatpush.bf16.msra.mxu0 0
      %261 = vmatpush.bf16.msra.mxu0 0
      %262 = vmatpush.bf16.msra.mxu0 0
      %263 = vmatpush.bf16.msra.mxu0 0
      %264 = vmatpush.bf16.msra.mxu0 %v255
      %265 = vmatmul.bf16.gmra.mxu0 %v251
      %v266 = vpop.f32.mrf.mxu0
      %v267 = vadd.f32 0.0, %v266
      %v268 = vpop.f32.mrf.mxu0
      %269 = vdwg.mxu0
      %v270 = vpack.c.bf16 %v196, %v196
      %272 = vrot.lane.b32.xlu0 %v270, 64
      %v273 = vpop.permute.xlu0 %272
      %v275 = vsel %vm253, %v273, 0
      %277 = vmatpush.bf16.msra.mxu0 0
      %278 = vmatpush.bf16.msra.mxu0 0
      %279 = vmatpush.bf16.msra.mxu0 0
      %280 = vmatpush.bf16.msra.mxu0 0
      %281 = vmatpush.bf16.msra.mxu0 0
      %282 = vmatpush.bf16.msra.mxu0 0
      %283 = vmatpush.bf16.msra.mxu0 0
      %284 = vmatpush.bf16.msra.mxu0 %v275
      %285 = vmatmul.bf16.gmra.mxu0 %v251
      %v286 = vpop.f32.mrf.mxu0
      %v287 = vadd.f32 0.0, %v286
      %v288 = vpop.f32.mrf.mxu0
      %289 = vdwg.mxu0
      %290 = vrot.lane.b32.xlu0 %v195, 120
      %v291 = vpop.permute.xlu0 %290
      %v293 = vsel %vm201, %v291, %v196
      %v294 = vpack.c.bf16 %v293, %v293
      %295 = vrot.lane.b32.xlu0 %v195, 88
      %v296 = vpop.permute.xlu0 %295
      %298 = vrot.lane.b32.xlu0 %v196, 96
      %v299 = vpop.permute.xlu0 %298
      %v301 = vsel %vm201, %v296, %v299
      %v302 = vpack.c.bf16 %v301, %v301
      %v304 = vsel %vm213, %v294, 0
      %v307 = vsel %vm213, %v302, 0
      %309 = vmatpush.bf16.xpose.msra.mxu0 0
      %310 = vmatpush.bf16.xpose.msra.mxu0 0
      %311 = vmatpush.bf16.xpose.msra.mxu0 0
      %312 = vmatpush.bf16.xpose.msra.mxu0 0
      %313 = vmatpush.bf16.xpose.msra.mxu0 0
      %314 = vmatpush.bf16.xpose.msra.mxu0 0
      %315 = vmatpush.bf16.xpose.msra.mxu0 0
      %316 = vmatpush.bf16.xpose.msra.mxu0 %v307
      %317 = vmatmul.bf16.gmra.mxu0 %v304
      %v318 = vpop.f32.mrf.mxu0
      %v319 = vadd.f32 0.0, %v318
      %v320 = vpop.f32.mrf.mxu0
      %321 = vdwg.mxu0
      %v322 = vmul.f32 %v319, 0.35355338
      %v323 = vsel %vm201, %v322, -inf
      %324 = vmax.xlane.f32.xlu0 %v323
      %v325 = vpop.xlane.xlu0 %324
      %v326 = vsub.f32 %v322, %v325
      %v327 = vmul.f32 %v326, 1.442695
      %v328 = vpow.pop %v327
      %v329 = vsel %vm201, %v328, 0.0
      %330 = vadd.xlane.f32.xlu0 %v329
      %v331 = vpop.xlane.xlu0 %330
      %v332 = vrcp.pop %v331
      %v333 = vmul.f32 %v328, %v332
      %v334 = vpack.c.bf16 %v333, %v333
      %335 = vrot.lane.b32.xlu0 %v246, 56
      %v336 = vpop.permute.xlu0 %335
      %v338 = vsel %vm201, %v334, 0
      %v341 = vsel %vm253, %v336, 0
      %343 = vmatpush.bf16.msra.mxu0 0
      %344 = vmatpush.bf16.msra.mxu0 0
      %345 = vmatpush.bf16.msra.mxu0 0
      %346 = vmatpush.bf16.msra.mxu0 0
      %347 = vmatpush.bf16.msra.mxu0 0
      %348 = vmatpush.bf16.msra.mxu0 0
      %349 = vmatpush.bf16.msra.mxu0 0
      %350 = vmatpush.bf16.msra.mxu0 %v341
      %351 = vmatmul.bf16.gmra.mxu0 %v338
      %v352 = vpop.f32.mrf.mxu0
      %v353 = vadd.f32 0.0, %v352
      %v354 = vpop.f32.mrf.mxu0
      %355 = vdwg.mxu0
      %356 = vrot.lane.b32.xlu0 %v270, 56
      %v357 = vpop.permute.xlu0 %356
      %v359 = vsel %vm253, %v357, 0
      %361 = vmatpush.bf16.msra.mxu0 0
      %362 = vmatpush.bf16.msra.mxu0 0
      %363 = vmatpush.bf16.msra.mxu0 0
      %364 = vmatpush.bf16.msra.mxu0 0
      %365 = vmatpush.bf16.msra.mxu0 0
      %366 = vmatpush.bf16.msra.mxu0 0
      %367 = vmatpush.bf16.msra.mxu0 0
      %368 = vmatpush.bf16.msra.mxu0 %v359
      %369 = vmatmul.bf16.gmra.mxu0 %v338
      %v370 = vpop.f32.mrf.mxu0
      %v371 = vadd.f32 0.0, %v370
      %v372 = vpop.f32.mrf.mxu0
      %373 = vdwg.mxu0
      %374 = vrot.lane.b32.xlu0 %v195, 112
      %v375 = vpop.permute.xlu0 %374
      %377 = vrot.lane.b32.xlu0 %v196, 120
      %v378 = vpop.permute.xlu0 %377
      %v380 = vsel %vm201, %v375, %v378
      %v381 = vpack.c.bf16 %v380, %v380
      %382 = vrot.lane.b32.xlu0 %v195, 80
      %v383 = vpop.permute.xlu0 %382
      %385 = vrot.lane.b32.xlu0 %v196, 88
      %v386 = vpop.permute.xlu0 %385
      %v388 = vsel %vm201, %v383, %v386
      %v389 = vpack.c.bf16 %v388, %v388
      %v391 = vsel %vm213, %v381, 0
      %v394 = vsel %vm213, %v389, 0
      %396 = vmatpush.bf16.xpose.msra.mxu0 0
      %397 = vmatpush.bf16.xpose.msra.mxu0 0
      %398 = vmatpush.bf16.xpose.msra.mxu0 0
      %399 = vmatpush.bf16.xpose.msra.mxu0 0
      %400 = vmatpush.bf16.xpose.msra.mxu0 0
      %401 = vmatpush.bf16.xpose.msra.mxu0 0
      %402 = vmatpush.bf16.xpose.msra.mxu0 0
      %403 = vmatpush.bf16.xpose.msra.mxu0 %v394
      %404 = vmatmul.bf16.gmra.mxu0 %v391
      %v405 = vpop.f32.mrf.mxu0
      %v406 = vadd.f32 0.0, %v405
      %v407 = vpop.f32.mrf.mxu0
      %408 = vdwg.mxu0
      %v409 = vmul.f32 %v406, 0.35355338
      %v410 = vsel %vm201, %v409, -inf
      %411 = vmax.xlane.f32.xlu0 %v410
      %v412 = vpop.xlane.xlu0 %411
      %v413 = vsub.f32 %v409, %v412
      %v414 = vmul.f32 %v413, 1.442695
      %v415 = vpow.pop %v414
      %v416 = vsel %vm201, %v415, 0.0
      %417 = vadd.xlane.f32.xlu0 %v416
      %v418 = vpop.xlane.xlu0 %417
      %v419 = vrcp.pop %v418
      %v420 = vmul.f32 %v415, %v419
      %v421 = vpack.c.bf16 %v420, %v420
      %422 = vrot.lane.b32.xlu0 %v246, 48
      %v423 = vpop.permute.xlu0 %422
      %v425 = vsel %vm201, %v421, 0
      %v428 = vsel %vm253, %v423, 0
      %430 = vmatpush.bf16.msra.mxu0 0
      %431 = vmatpush.bf16.msra.mxu0 0
      %432 = vmatpush.bf16.msra.mxu0 0
      %433 = vmatpush.bf16.msra.mxu0 0
      %434 = vmatpush.bf16.msra.mxu0 0
      %435 = vmatpush.bf16.msra.mxu0 0
      %436 = vmatpush.bf16.msra.mxu0 0
      %437 = vmatpush.bf16.msra.mxu0 %v428
      %438 = vmatmul.bf16.gmra.mxu0 %v425
      %v439 = vpop.f32.mrf.mxu0
      %v440 = vadd.f32 0.0, %v439
      %v441 = vpop.f32.mrf.mxu0
      %442 = vdwg.mxu0
      %443 = vrot.lane.b32.xlu0 %v270, 48
      %v444 = vpop.permute.xlu0 %443
      %v446 = vsel %vm253, %v444, 0
      %448 = vmatpush.bf16.msra.mxu0 0
      %449 = vmatpush.bf16.msra.mxu0 0
      %450 = vmatpush.bf16.msra.mxu0 0
      %451 = vmatpush.bf16.msra.mxu0 0
      %452 = vmatpush.bf16.msra.mxu0 0
      %453 = vmatpush.bf16.msra.mxu0 0
      %454 = vmatpush.bf16.msra.mxu0 0
      %455 = vmatpush.bf16.msra.mxu0 %v446
      %456 = vmatmul.bf16.gmra.mxu0 %v425
      %v457 = vpop.f32.mrf.mxu0
      %v458 = vadd.f32 0.0, %v457
      %v459 = vpop.f32.mrf.mxu0
      %460 = vdwg.mxu0
      %461 = vrot.lane.b32.xlu0 %v195, 104
      %v462 = vpop.permute.xlu0 %461
      %464 = vrot.lane.b32.xlu0 %v196, 112
      %v465 = vpop.permute.xlu0 %464
      %v467 = vsel %vm201, %v462, %v465
      %v468 = vpack.c.bf16 %v467, %v467
      %469 = vrot.lane.b32.xlu0 %v195, 72
      %v470 = vpop.permute.xlu0 %469
      %472 = vrot.lane.b32.xlu0 %v196, 80
      %v473 = vpop.permute.xlu0 %472
      %v475 = vsel %vm201, %v470, %v473
      %v476 = vpack.c.bf16 %v475, %v475
      %v478 = vsel %vm213, %v468, 0
      %v481 = vsel %vm213, %v476, 0
      %483 = vmatpush.bf16.xpose.msra.mxu0 0
      %484 = vmatpush.bf16.xpose.msra.mxu0 0
      %485 = vmatpush.bf16.xpose.msra.mxu0 0
      %486 = vmatpush.bf16.xpose.msra.mxu0 0
      %487 = vmatpush.bf16.xpose.msra.mxu0 0
      %488 = vmatpush.bf16.xpose.msra.mxu0 0
      %489 = vmatpush.bf16.xpose.msra.mxu0 0
      %490 = vmatpush.bf16.xpose.msra.mxu0 %v481
      %491 = vmatmul.bf16.gmra.mxu0 %v478
      %v492 = vpop.f32.mrf.mxu0
      %v493 = vadd.f32 0.0, %v492
      %v494 = vpop.f32.mrf.mxu0
      %495 = vdwg.mxu0
      %v496 = vmul.f32 %v493, 0.35355338
      %v497 = vsel %vm201, %v496, -inf
      %498 = vmax.xlane.f32.xlu0 %v497
      %v499 = vpop.xlane.xlu0 %498
      %v500 = vsub.f32 %v496, %v499
      %v501 = vmul.f32 %v500, 1.442695
      %v502 = vpow.pop %v501
      %v503 = vsel %vm201, %v502, 0.0
      %504 = vadd.xlane.f32.xlu0 %v503
      %v505 = vpop.xlane.xlu0 %504
      %v506 = vrcp.pop %v505
      %v507 = vmul.f32 %v502, %v506
      %v508 = vpack.c.bf16 %v507, %v507
      %509 = vrot.lane.b32.xlu0 %v246, 40
      %v510 = vpop.permute.xlu0 %509
      %v512 = vsel %vm201, %v508, 0
      %v515 = vsel %vm253, %v510, 0
      %517 = vmatpush.bf16.msra.mxu0 0
      %518 = vmatpush.bf16.msra.mxu0 0
      %519 = vmatpush.bf16.msra.mxu0 0
      %520 = vmatpush.bf16.msra.mxu0 0
      %521 = vmatpush.bf16.msra.mxu0 0
      %522 = vmatpush.bf16.msra.mxu0 0
      %523 = vmatpush.bf16.msra.mxu0 0
      %524 = vmatpush.bf16.msra.mxu0 %v515
      %525 = vmatmul.bf16.gmra.mxu0 %v512
      %v526 = vpop.f32.mrf.mxu0
      %v527 = vadd.f32 0.0, %v526
      %v528 = vpop.f32.mrf.mxu0
      %529 = vdwg.mxu0
      %530 = vrot.lane.b32.xlu0 %v270, 40
      %v531 = vpop.permute.xlu0 %530
      %v533 = vsel %vm253, %v531, 0
      %535 = vmatpush.bf16.msra.mxu0 0
      %536 = vmatpush.bf16.msra.mxu0 0
      %537 = vmatpush.bf16.msra.mxu0 0
      %538 = vmatpush.bf16.msra.mxu0 0
      %539 = vmatpush.bf16.msra.mxu0 0
      %540 = vmatpush.bf16.msra.mxu0 0
      %541 = vmatpush.bf16.msra.mxu0 0
      %542 = vmatpush.bf16.msra.mxu0 %v533
      %543 = vmatmul.bf16.gmra.mxu0 %v512
      %v544 = vpop.f32.mrf.mxu0
      %v545 = vadd.f32 0.0, %v544
      %v546 = vpop.f32.mrf.mxu0
      %547 = vdwg.mxu0
      %549 = vrot.lane.b32.xlu0 %v353, 8
      %v550 = vpop.permute.xlu0 %549
      %553 = vrot.lane.b32.xlu0 %v440, 16
      %v554 = vpop.permute.xlu0 %553
      %557 = vrot.lane.b32.xlu0 %v527, 24
      %v558 = vpop.permute.xlu0 %557
      %v560 = vsel %vm201, %v267, %v550
      %v561 = vsel %vm213, %v560, %v554
      %vm562 = vcmask 195584
      %v563 = vsel %vm562, %v561, %v558
      %vm564 = vcmask 261120
      %565 = vst.msk [vmem:[%s189] sm:$0xff] %vm564, %v563
      %567 = vrot.lane.b32.xlu0 %v371, 8
      %v568 = vpop.permute.xlu0 %567
      %571 = vrot.lane.b32.xlu0 %v458, 16
      %v572 = vpop.permute.xlu0 %571
      %575 = vrot.lane.b32.xlu0 %v545, 24
      %v576 = vpop.permute.xlu0 %575
      %v578 = vsel %vm201, %v287, %v568
      %v579 = vsel %vm213, %v578, %v572
      %v580 = vsel %vm562, %v579, %v576
      %581 = vst.msk [vmem:[%s193] sm:$0xff] %vm564, %v580
      %p582 = scmp.lt.s32.totalorder %s15, 1
      %s583 = scalar_select %p582, %s15, 1
      %s584 = smul.addr %s583, 8
      %s585 = scalar_lea.vmem %s2, %s584
      %p586 = scmp.lt.s32.totalorder %s15, 1
      %s587 = scalar_select %p586, %s15, 1
      %s588 = smul.addr %s587, 8
      %s589 = scalar_lea.vmem %s3, %s588
      // Predicated region
      $region29: #{encoder_block_forward.5} parent=27 // pred_check
        %p590 = pneg %p85
      $region30: #{encoder_block_forward.5} parent=27 // pred_check_branch
        %592 = sbr.rel (%p590) target = $region32
      $region31: #{encoder_block_forward.5} parent=27 // pred_region
        _
      $region32: #{encoder_block_forward.5} parent=27 // pred_fallthru
        _
      // Predicated region
      $region33: #{encoder_block_forward.5} parent=27 // pred_check
        %p593 = pneg %p111
      $region34: #{encoder_block_forward.5} parent=27 // pred_check_branch
        %595 = sbr.rel (%p593) target = $region36
      $region35: #{encoder_block_forward.5} parent=27 // pred_region
        _
      $region36: #{encoder_block_forward.5} parent=27 // pred_fallthru
        _
    $region28: #{encoder_block_forward.5} parent=5 // pred_fallthru
      _
    %p596 = scmp.le.s32.totalorder 2, %s10
    // Predicated region
    $region37: #{encoder_block_forward.5} parent=5 // pred_check
      %p597 = pneg %p596
    $region38: #{encoder_block_forward.5} parent=5 // pred_check_branch
      %599 = sbr.rel (%p597) target = $region40
    $region39: #{encoder_block_forward.5} parent=5 // pred_region
      %s600 = ssub.s32 %s10, 2
      // Predicated region
      $region41: #{encoder_block_forward.5} parent=39 // pred_check
        %p601 = pneg %p91
      $region42: #{encoder_block_forward.5} parent=39 // pred_check_branch
        %603 = sbr.rel (%p601) target = $region44
      $region43: #{encoder_block_forward.5} parent=39 // pred_region
        %p604 = scmp.lt.s32.totalorder %s16, 1
        %s605 = scalar_select %p604, %s16, 1
        %s606 = smul.addr %s605, 8
        %s607 = scalar_lea.vmem %s2, %s606
      $region44: #{encoder_block_forward.5} parent=39 // pred_fallthru
        _
      // Predicated region
      $region45: #{encoder_block_forward.5} parent=39 // pred_check
        %p608 = pneg %p117
      $region46: #{encoder_block_forward.5} parent=39 // pred_check_branch
        %610 = sbr.rel (%p608) target = $region48
      $region47: #{encoder_block_forward.5} parent=39 // pred_region
        %p611 = scmp.lt.s32.totalorder %s16, 1
        %s612 = scalar_select %p611, %s16, 1
        %s613 = smul.addr %s612, 8
        %s614 = scalar_lea.vmem %s3, %s613
      $region48: #{encoder_block_forward.5} parent=39 // pred_fallthru
        _
    $region40: #{encoder_block_forward.5} parent=5 // pred_fallthru
      _
  $region6: #{encoder_block_forward.5} parent=0 // loop_footer
    %s14 = sadd.s32 1, %s10
  $region7: #{encoder_block_forward.5} parent=0 // loop_footer_branch
    %9 = sbr.rel target = $region3
  $region8: #{encoder_block_forward.5} parent=0 // loop_exit
    _

// kernel: encoder_block_forward.6
$region0: #{encoder_block_forward.6}
  #allocation0 [shape = 'u32[]', space=smem, size = 0x4, offset = 0x4, fixed_abs, tag = 'smem constant byte address 0x4 - core index']
  #allocation1 [shape = 'u32[72,128]{1,0:T(1,128)}', space=vmem, size = 0x9000, scoped, tag = 'internal scratch']
  %s0 = inlined_call_operand.vmem [shape: f32[16,32], index: 0, kind: input, shape index: {}]
  %s1 = inlined_call_operand.vmem [shape: f32[16,32], index: 1, kind: input, shape index: {}]
  %s2 = inlined_call_operand.vmem [shape: f32[16,32], index: 2, kind: input, shape index: {}]
  %s3 = inlined_call_operand.vmem [shape: f32[16,32], index: 3, kind: input, shape index: {}]
  %s4 = inlined_call_operand.vmem [shape: bf16[32,32], index: 4, kind: input, shape index: {}]
  %s5 = inlined_call_operand.vmem [shape: bf16[32,32], index: 5, kind: input, shape index: {}]
  %s6 = inlined_call_operand.vmem [shape: bf16[32,32], index: 6, kind: input, shape index: {}]
  %s7 = inlined_call_operand.vmem [shape: f32[1,32], index: 7, kind: input, shape index: {}]
  %s8 = inlined_call_operand.vmem [shape: f32[1,32], index: 8, kind: input, shape index: {}]
  %s9 = inlined_call_operand.vmem [shape: f32[1,32], index: 9, kind: input, shape index: {}]
  %s10 = inlined_call_operand.vmem [shape: f32[1,32], index: 10, kind: input, shape index: {}]
  %s11 = inlined_call_operand.vmem [shape: f32[1,32], index: 11, kind: input, shape index: {}]
  %s12 = inlined_call_operand.vmem [shape: f32[1,32], index: 12, kind: input, shape index: {}]
  %s13 = inlined_call_operand.vmem [shape: f32[16,32], index: 13, kind: output, shape index: {0}]
  %s14 = inlined_call_operand.vmem [shape: f32[16,32], index: 14, kind: output, shape index: {1}]
  %15 = xla_tuple %s13, %s14
  %s16 = sld [smem:[#allocation0]]
  $region70: #{encoder_block_forward.6} parent=0
    _
  %s18 = ssub.s32 1, %s16
  %s19 = scalar_select 0, %s18, %s16
  // Predicated region
  $region2: #{encoder_block_forward.6} parent=0 // pred_check
    _
  $region3: #{encoder_block_forward.6} parent=0 // pred_check_branch
    %21 = sbr.rel (0) target = $region5
  $region4: #{encoder_block_forward.6} parent=0 // pred_region
    _
  $region5: #{encoder_block_forward.6} parent=0 // pred_fallthru
    _
  // Predicated region
  $region6: #{encoder_block_forward.6} parent=0 // pred_check
    _
  $region7: #{encoder_block_forward.6} parent=0 // pred_check_branch
    %23 = sbr.rel (0) target = $region9
  $region8: #{encoder_block_forward.6} parent=0 // pred_region
    _
  $region9: #{encoder_block_forward.6} parent=0 // pred_fallthru
    _
  // Predicated region
  $region10: #{encoder_block_forward.6} parent=0 // pred_check
    _
  $region11: #{encoder_block_forward.6} parent=0 // pred_check_branch
    %25 = sbr.rel (0) target = $region13
  $region12: #{encoder_block_forward.6} parent=0 // pred_region
    _
  $region13: #{encoder_block_forward.6} parent=0 // pred_fallthru
    _
  // Predicated region
  $region14: #{encoder_block_forward.6} parent=0 // pred_check
    _
  $region15: #{encoder_block_forward.6} parent=0 // pred_check_branch
    %27 = sbr.rel (0) target = $region17
  $region16: #{encoder_block_forward.6} parent=0 // pred_region
    _
  $region17: #{encoder_block_forward.6} parent=0 // pred_fallthru
    _
  // Predicated region
  $region18: #{encoder_block_forward.6} parent=0 // pred_check
    _
  $region19: #{encoder_block_forward.6} parent=0 // pred_check_branch
    %29 = sbr.rel (0) target = $region21
  $region20: #{encoder_block_forward.6} parent=0 // pred_region
    _
  $region21: #{encoder_block_forward.6} parent=0 // pred_fallthru
    _
  // Predicated region
  $region22: #{encoder_block_forward.6} parent=0 // pred_check
    _
  $region23: #{encoder_block_forward.6} parent=0 // pred_check_branch
    %31 = sbr.rel (0) target = $region25
  $region24: #{encoder_block_forward.6} parent=0 // pred_region
    _
  $region25: #{encoder_block_forward.6} parent=0 // pred_fallthru
    _
  // Predicated region
  $region26: #{encoder_block_forward.6} parent=0 // pred_check
    _
  $region27: #{encoder_block_forward.6} parent=0 // pred_check_branch
    %33 = sbr.rel (0) target = $region29
  $region28: #{encoder_block_forward.6} parent=0 // pred_region
    _
  $region29: #{encoder_block_forward.6} parent=0 // pred_fallthru
    _
  // Predicated region
  $region30: #{encoder_block_forward.6} parent=0 // pred_check
    _
  $region31: #{encoder_block_forward.6} parent=0 // pred_check_branch
    %35 = sbr.rel (0) target = $region33
  $region32: #{encoder_block_forward.6} parent=0 // pred_region
    _
  $region33: #{encoder_block_forward.6} parent=0 // pred_fallthru
    _
  // Predicated region
  $region34: #{encoder_block_forward.6} parent=0 // pred_check
    _
  $region35: #{encoder_block_forward.6} parent=0 // pred_check_branch
    %37 = sbr.rel (0) target = $region37
  $region36: #{encoder_block_forward.6} parent=0 // pred_region
    _
  $region37: #{encoder_block_forward.6} parent=0 // pred_fallthru
    _
  // Predicated region
  $region38: #{encoder_block_forward.6} parent=0 // pred_check
    _
  $region39: #{encoder_block_forward.6} parent=0 // pred_check_branch
    %39 = sbr.rel (0) target = $region41
  $region40: #{encoder_block_forward.6} parent=0 // pred_region
    _
  $region41: #{encoder_block_forward.6} parent=0 // pred_fallthru
    _
  // Predicated region
  $region42: #{encoder_block_forward.6} parent=0 // pred_check
    _
  $region43: #{encoder_block_forward.6} parent=0 // pred_check_branch
    %41 = sbr.rel (0) target = $region45
  $region44: #{encoder_block_forward.6} parent=0 // pred_region
    _
  $region45: #{encoder_block_forward.6} parent=0 // pred_fallthru
    _
  // Predicated region
  $region46: #{encoder_block_forward.6} parent=0 // pred_check
    _
  $region47: #{encoder_block_forward.6} parent=0 // pred_check_branch
    %43 = sbr.rel (0) target = $region49
  $region48: #{encoder_block_forward.6} parent=0 // pred_region
    _
  $region49: #{encoder_block_forward.6} parent=0 // pred_fallthru
    _
  // Predicated region
  $region50: #{encoder_block_forward.6} parent=0 // pred_check
    _
  $region51: #{encoder_block_forward.6} parent=0 // pred_check_branch
    %45 = sbr.rel (0) target = $region53
  $region52: #{encoder_block_forward.6} parent=0 // pred_region
    _
  $region53: #{encoder_block_forward.6} parent=0 // pred_fallthru
    _
  %v47 = vld [vmem:[%s0] sm:$0xff]
  %v48 = vld [vmem:[%s0 + $0x8] sm:$0xff]
  %v49 = vld [vmem:[%s1] sm:$0xff]
  %v50 = vld [vmem:[%s1 + $0x8] sm:$0xff]
  %v51 = vadd.f32 %v47, %v49
  %v52 = vadd.f32 %v48, %v50
  %v53 = vpack.c.bf16 %v52, %v51
  %v54 = vpack.c.bf16 %v48, %v47
  %v55 = vld [vmem:[%s4] sm:$0xf]
  %v56 = vld [vmem:[%s4 + $0x4] sm:$0xf]
  %v57 = vld [vmem:[%s4 + $0x8] sm:$0xf]
  %v58 = vld [vmem:[%s4 + $0xc] sm:$0xf]
  %v63 = vunpack.c.l.b16 %v55
  %v64 = vunpack.c.l.b16 %v56
  %v65 = vunpack.c.l.b16 %v57
  %v66 = vunpack.c.l.b16 %v58
  %v67 = vpack.c.b16 %v64, %v63
  %v68 = vpack.c.b16 %v66, %v65
  %vm71 = vcmask 261120
  %v73 = vsel %vm71, %v54, 0
  %75 = vmatpush.bf16.msra.mxu0 0
  %76 = vmatpush.bf16.msra.mxu0 0
  %77 = vmatpush.bf16.msra.mxu0 0
  %78 = vmatpush.bf16.msra.mxu0 0
  %79 = vmatpush.bf16.msra.mxu0 0
  %80 = vmatpush.bf16.msra.mxu0 0
  %81 = vmatpush.bf16.msra.mxu0 %v68
  %82 = vmatpush.bf16.msra.mxu0 %v67
  %83 = vmatmul.bf16.gmra.mxu0 %v73
  %v84 = vpop.f32.mrf.mxu0
  %v85 = vadd.f32 0.0, %v84
  %v86 = vpop.f32.mrf.mxu0
  %v87 = vadd.f32 0.0, %v86
  %88 = vdwg.mxu0
  %v89 = vpack.c.bf16 %v50, %v49
  %v90 = vld [vmem:[%s5] sm:$0xf]
  %v91 = vld [vmem:[%s5 + $0x4] sm:$0xf]
  %v92 = vld [vmem:[%s5 + $0x8] sm:$0xf]
  %v93 = vld [vmem:[%s5 + $0xc] sm:$0xf]
  %v98 = vunpack.c.l.b16 %v90
  %v99 = vunpack.c.l.b16 %v91
  %v100 = vunpack.c.l.b16 %v92
  %v101 = vunpack.c.l.b16 %v93
  %v102 = vpack.c.b16 %v99, %v98
  %v103 = vpack.c.b16 %v101, %v100
  %v107 = vsel %vm71, %v89, 0
  %109 = vmatpush.bf16.msra.mxu0 0
  %110 = vmatpush.bf16.msra.mxu0 0
  %111 = vmatpush.bf16.msra.mxu0 0
  %112 = vmatpush.bf16.msra.mxu0 0
  %113 = vmatpush.bf16.msra.mxu0 0
  %114 = vmatpush.bf16.msra.mxu0 0
  %115 = vmatpush.bf16.msra.mxu0 %v103
  %116 = vmatpush.bf16.msra.mxu0 %v102
  %117 = vmatmul.bf16.gmra.mxu0 %v107
  %v118 = vpop.f32.mrf.mxu0
  %v119 = vadd.f32 0.0, %v118
  %v120 = vpop.f32.mrf.mxu0
  %v121 = vadd.f32 0.0, %v120
  %122 = vdwg.mxu0
  %v123 = vld [vmem:[%s6] sm:$0xf]
  %v124 = vld [vmem:[%s6 + $0x4] sm:$0xf]
  %v125 = vld [vmem:[%s6 + $0x8] sm:$0xf]
  %v126 = vld [vmem:[%s6 + $0xc] sm:$0xf]
  %v131 = vunpack.c.l.b16 %v123
  %v132 = vunpack.c.l.b16 %v124
  %v133 = vunpack.c.l.b16 %v125
  %v134 = vunpack.c.l.b16 %v126
  %v135 = vpack.c.b16 %v132, %v131
  %v136 = vpack.c.b16 %v134, %v133
  %v140 = vsel %vm71, %v53, 0
  %142 = vmatpush.bf16.msra.mxu0 0
  %143 = vmatpush.bf16.msra.mxu0 0
  %144 = vmatpush.bf16.msra.mxu0 0
  %145 = vmatpush.bf16.msra.mxu0 0
  %146 = vmatpush.bf16.msra.mxu0 0
  %147 = vmatpush.bf16.msra.mxu0 0
  %148 = vmatpush.bf16.msra.mxu0 %v136
  %149 = vmatpush.bf16.msra.mxu0 %v135
  %150 = vmatmul.bf16.gmra.mxu0 %v140
  %v151 = vpop.f32.mrf.mxu0
  %v152 = vadd.f32 0.0, %v151
  %v153 = vpop.f32.mrf.mxu0
  %v154 = vadd.f32 0.0, %v153
  %155 = vdwg.mxu0
  %v156 = vsub.f32 %v85, %v119
  %v157 = vsub.f32 %v87, %v121
  %v158 = vld [vmem:[%s7] sm:$0x1]
  %v160 = vperm.slane %v158, 0
  %v162 = vadd.f32 %v156, %v160
  %v163 = vadd.f32 %v157, %v160
  %v164 = vsub.f32 %v152, %v85
  %v165 = vsub.f32 %v154, %v87
  %v166 = vsub.f32 %v164, %v119
  %v167 = vsub.f32 %v165, %v121
  %v168 = vld [vmem:[%s8] sm:$0x1]
  %v170 = vperm.slane %v168, 0
  %v172 = vadd.f32 %v166, %v170
  %v173 = vadd.f32 %v167, %v170
  %v174 = vld [vmem:[%s2] sm:$0xff]
  %v175 = vld [vmem:[%s2 + $0x8] sm:$0xff]
  %v176 = vadd.f32 %v174, %v162
  %v177 = vadd.f32 %v175, %v163
  %v178 = vld [vmem:[%s3] sm:$0xff]
  %v179 = vld [vmem:[%s3 + $0x8] sm:$0xff]
  %v180 = vadd.f32 %v178, %v172
  %v181 = vadd.f32 %v179, %v173
  %v182 = vld [vmem:[%s9] sm:$0x1]
  %v183 = vld [vmem:[%s10] sm:$0x1]
  %v184 = vsel %vm71, %v176, 0.0
  %185 = vadd.xlane.f32.xlu0 %v184
  %v186 = vpop.xlane.xlu0 %185
  %v187 = vsel %vm71, %v177, 0.0
  %188 = vadd.xlane.f32.xlu0 %v187
  %v189 = vpop.xlane.xlu0 %188
  %v190 = vrcp.pop 32.0
  %v191 = vmul.f32 32.0, %v190
  %v192 = vsub.f32 1.0, %v191
  %v193 = vmul.f32 %v190, %v192
  %v194 = vadd.f32 %v190, %v193
  %vm195 = vweird.f32 %v190
  %v196 = vsel %vm195, %v190, %v194
  %v197 = vmul.f32 %v186, %v196
  %v198 = vmul.f32 %v189, %v196
  %v199 = vsub.f32 %v176, %v197
  %v200 = vsub.f32 %v177, %v198
  %v201 = vmul.f32 %v199, %v199
  %v202 = vmul.f32 %v200, %v200
  %v203 = vsel %vm71, %v201, 0.0
  %204 = vadd.xlane.f32.xlu0 %v203
  %v205 = vpop.xlane.xlu0 %204
  %v206 = vsel %vm71, %v202, 0.0
  %207 = vadd.xlane.f32.xlu0 %v206
  %v208 = vpop.xlane.xlu0 %207
  %v209 = vmul.f32 %v205, %v196
  %v210 = vmul.f32 %v208, %v196
  %v211 = vadd.f32 %v209, 1e-05
  %v212 = vadd.f32 %v210, 1e-05
  %v213 = vrsqrt.pop %v211
  %v214 = vmul.f32 %v213, %v211
  %v215 = vmul.f32 %v214, %v213
  %v216 = vmul.f32 0.5, %v215
  %v217 = vsub.f32 1.5, %v216
  %v218 = vmul.f32 %v213, %v217
  %vm219 = vweird.f32 %v211
  %vm220 = vweird.f32 %v213
  %vm221 = vmor %vm219, %vm220
  %v222 = vsel %vm221, %v213, %v218
  %v223 = vrsqrt.pop %v212
  %v224 = vmul.f32 %v223, %v212
  %v225 = vmul.f32 %v224, %v223
  %v226 = vmul.f32 0.5, %v225
  %v227 = vsub.f32 1.5, %v226
  %v228 = vmul.f32 %v223, %v227
  %vm229 = vweird.f32 %v212
  %vm230 = vweird.f32 %v223
  %vm231 = vmor %vm229, %vm230
  %v232 = vsel %vm231, %v223, %v228
  %v233 = vmul.f32 %v199, %v222
  %v234 = vmul.f32 %v200, %v232
  %v236 = vperm.slane %v182, 0
  %v238 = vmul.f32 %v233, %v236
  %v239 = vmul.f32 %v234, %v236
  %v241 = vperm.slane %v183, 0
  %v243 = vadd.f32 %v238, %v241
  %v244 = vadd.f32 %v239, %v241
  %245 = vst.msk [vmem:[%s13] sm:$0xff] %vm71, %v243
  %246 = vst.msk [vmem:[%s13 + $0x8] sm:$0xff] %vm71, %v244
  %v247 = vld [vmem:[%s11] sm:$0x1]
  %v248 = vld [vmem:[%s12] sm:$0x1]
  %v249 = vsel %vm71, %v180, 0.0
  %250 = vadd.xlane.f32.xlu0 %v249
  %v251 = vpop.xlane.xlu0 %250
  %v252 = vsel %vm71, %v181, 0.0
  %253 = vadd.xlane.f32.xlu0 %v252
  %v254 = vpop.xlane.xlu0 %253
  %v255 = vmul.f32 %v251, %v196
  %v256 = vmul.f32 %v254, %v196
  %v257 = vsub.f32 %v180, %v255
  %v258 = vsub.f32 %v181, %v256
  %v259 = vmul.f32 %v257, %v257
  %v260 = vmul.f32 %v258, %v258
  %v261 = vsel %vm71, %v259, 0.0
  %262 = vadd.xlane.f32.xlu0 %v261
  %v263 = vpop.xlane.xlu0 %262
  %v264 = vsel %vm71, %v260, 0.0
  %265 = vadd.xlane.f32.xlu0 %v264
  %v266 = vpop.xlane.xlu0 %265
  %v267 = vmul.f32 %v263, %v196
  %v268 = vmul.f32 %v266, %v196
  %v269 = vadd.f32 %v267, 1e-05
  %v270 = vadd.f32 %v268, 1e-05
  %v271 = vrsqrt.pop %v269
  %v272 = vmul.f32 %v271, %v269
  %v273 = vmul.f32 %v272, %v271
  %v274 = vmul.f32 0.5, %v273
  %v275 = vsub.f32 1.5, %v274
  %v276 = vmul.f32 %v271, %v275
  %vm277 = vweird.f32 %v269
  %vm278 = vweird.f32 %v271
  %vm279 = vmor %vm277, %vm278
  %v280 = vsel %vm279, %v271, %v276
  %v281 = vrsqrt.pop %v270
  %v282 = vmul.f32 %v281, %v270
  %v283 = vmul.f32 %v282, %v281
  %v284 = vmul.f32 0.5, %v283
  %v285 = vsub.f32 1.5, %v284
  %v286 = vmul.f32 %v281, %v285
  %vm287 = vweird.f32 %v270
  %vm288 = vweird.f32 %v281
  %vm289 = vmor %vm287, %vm288
  %v290 = vsel %vm289, %v281, %v286
  %v291 = vmul.f32 %v257, %v280
  %v292 = vmul.f32 %v258, %v290
  %v294 = vperm.slane %v247, 0
  %v296 = vmul.f32 %v291, %v294
  %v297 = vmul.f32 %v292, %v294
  %v299 = vperm.slane %v248, 0
  %v301 = vadd.f32 %v296, %v299
  %v302 = vadd.f32 %v297, %v299
  %303 = vst.msk [vmem:[%s14] sm:$0xff] %vm71, %v301
  %304 = vst.msk [vmem:[%s14 + $0x8] sm:$0xff] %vm71, %v302
  // Predicated region
  $region54: #{encoder_block_forward.6} parent=0 // pred_check
    _
  $region55: #{encoder_block_forward.6} parent=0 // pred_check_branch
    %306 = sbr.rel (0) target = $region57
  $region56: #{encoder_block_forward.6} parent=0 // pred_region
    _
  $region57: #{encoder_block_forward.6} parent=0 // pred_fallthru
    _
  // Predicated region
  $region58: #{encoder_block_forward.6} parent=0 // pred_check
    _
  $region59: #{encoder_block_forward.6} parent=0 // pred_check_branch
    %308 = sbr.rel (0) target = $region61
  $region60: #{encoder_block_forward.6} parent=0 // pred_region
    _
  $region61: #{encoder_block_forward.6} parent=0 // pred_fallthru
    _
  // Predicated region
  $region62: #{encoder_block_forward.6} parent=0 // pred_check
    _
  $region63: #{encoder_block_forward.6} parent=0 // pred_check_branch
    %310 = sbr.rel (0) target = $region65
  $region64: #{encoder_block_forward.6} parent=0 // pred_region
    _
  $region65: #{encoder_block_forward.6} parent=0 // pred_fallthru
    _
  // Predicated region
  $region66: #{encoder_block_forward.6} parent=0 // pred_check
    _
  $region67: #{encoder_block_forward.6} parent=0 // pred_check_branch
    %312 = sbr.rel (0) target = $region69
  $region68: #{encoder_block_forward.6} parent=0 // pred_region
    _
  $region69: #{encoder_block_forward.6} parent=0 // pred_fallthru
    _

// kernel: encoder_block_forward.7
$region0: #{encoder_block_forward.7}
  #allocation0 [shape = 'u32[]', space=smem, size = 0x4, offset = 0x4, fixed_abs, tag = 'smem constant byte address 0x4 - core index']
  #allocation1 [shape = 'u32[72,128]{1,0:T(1,128)}', space=vmem, size = 0x9000, scoped, tag = 'internal scratch']
  %s0 = inlined_call_operand.vmem [shape: f32[16,32], index: 0, kind: input, shape index: {}]
  %s1 = inlined_call_operand.vmem [shape: f32[16,32], index: 1, kind: input, shape index: {}]
  %s2 = inlined_call_operand.vmem [shape: bf16[32,64], index: 2, kind: input, shape index: {}]
  %s3 = inlined_call_operand.vmem [shape: bf16[32,64], index: 3, kind: input, shape index: {}]
  %s4 = inlined_call_operand.vmem [shape: bf16[32,64], index: 4, kind: input, shape index: {}]
  %s5 = inlined_call_operand.vmem [shape: f32[1,64], index: 5, kind: input, shape index: {}]
  %s6 = inlined_call_operand.vmem [shape: f32[1,64], index: 6, kind: input, shape index: {}]
  %s7 = inlined_call_operand.vmem [shape: bf16[64,32], index: 7, kind: input, shape index: {}]
  %s8 = inlined_call_operand.vmem [shape: bf16[64,32], index: 8, kind: input, shape index: {}]
  %s9 = inlined_call_operand.vmem [shape: bf16[64,32], index: 9, kind: input, shape index: {}]
  %s10 = inlined_call_operand.vmem [shape: f32[1,32], index: 10, kind: input, shape index: {}]
  %s11 = inlined_call_operand.vmem [shape: f32[1,32], index: 11, kind: input, shape index: {}]
  %s12 = inlined_call_operand.vmem [shape: f32[1,32], index: 12, kind: input, shape index: {}]
  %s13 = inlined_call_operand.vmem [shape: f32[1,32], index: 13, kind: input, shape index: {}]
  %s14 = inlined_call_operand.vmem [shape: f32[1,32], index: 14, kind: input, shape index: {}]
  %s15 = inlined_call_operand.vmem [shape: f32[1,32], index: 15, kind: input, shape index: {}]
  %s16 = inlined_call_operand.hbm [shape: f32[16,32], index: 16, kind: output, shape index: {0}]
  %s17 = inlined_call_operand.hbm [shape: f32[16,32], index: 17, kind: output, shape index: {1}]
  %18 = xla_tuple %s16, %s17
  %s19 = sld [smem:[#allocation0]]
  $region82: #{encoder_block_forward.7} parent=0
    _
  %s21 = ssub.s32 1, %s19
  %s22 = scalar_select 0, %s21, %s19
  $region1: #{encoder_block_forward.7} parent=0
    #allocation2 [shape = 'u8[8192]{0}', space=vmem, size = 0x2000, scoped, tag = 'output window, operand 0, single buffered']
    #allocation3 [shape = 's32[1]{0}', space=sflag, size = 0x4, scoped, tag = 'scoped memory for encoder_block_forward.7']
    #allocation4 [shape = 'u8[8192]{0}', space=vmem, size = 0x2000, scoped, tag = 'output window, operand 1, single buffered']
    #allocation5 [shape = 's32[1]{0}', space=sflag, size = 0x4, scoped, tag = 'scoped memory for encoder_block_forward.7']
    %23 = vsyncpa [#allocation3], 0
    %24 = vsyncpa [#allocation5], 0
    // Predicated region
    $region2: #{encoder_block_forward.7} parent=1 // pred_check
      _
    $region3: #{encoder_block_forward.7} parent=1 // pred_check_branch
      %26 = sbr.rel (0) target = $region5
    $region4: #{encoder_block_forward.7} parent=1 // pred_region
      _
    $region5: #{encoder_block_forward.7} parent=1 // pred_fallthru
      _
    // Predicated region
    $region6: #{encoder_block_forward.7} parent=1 // pred_check
      _
    $region7: #{encoder_block_forward.7} parent=1 // pred_check_branch
      %28 = sbr.rel (0) target = $region9
    $region8: #{encoder_block_forward.7} parent=1 // pred_region
      _
    $region9: #{encoder_block_forward.7} parent=1 // pred_fallthru
      _
    // Predicated region
    $region10: #{encoder_block_forward.7} parent=1 // pred_check
      _
    $region11: #{encoder_block_forward.7} parent=1 // pred_check_branch
      %30 = sbr.rel (0) target = $region13
    $region12: #{encoder_block_forward.7} parent=1 // pred_region
      _
    $region13: #{encoder_block_forward.7} parent=1 // pred_fallthru
      _
    // Predicated region
    $region14: #{encoder_block_forward.7} parent=1 // pred_check
      _
    $region15: #{encoder_block_forward.7} parent=1 // pred_check_branch
      %32 = sbr.rel (0) target = $region17
    $region16: #{encoder_block_forward.7} parent=1 // pred_region
      _
    $region17: #{encoder_block_forward.7} parent=1 // pred_fallthru
      _
    // Predicated region
    $region18: #{encoder_block_forward.7} parent=1 // pred_check
      _
    $region19: #{encoder_block_forward.7} parent=1 // pred_check_branch
      %34 = sbr.rel (0) target = $region21
    $region20: #{encoder_block_forward.7} parent=1 // pred_region
      _
    $region21: #{encoder_block_forward.7} parent=1 // pred_fallthru
      _
    // Predicated region
    $region22: #{encoder_block_forward.7} parent=1 // pred_check
      _
    $region23: #{encoder_block_forward.7} parent=1 // pred_check_branch
      %36 = sbr.rel (0) target = $region25
    $region24: #{encoder_block_forward.7} parent=1 // pred_region
      _
    $region25: #{encoder_block_forward.7} parent=1 // pred_fallthru
      _
    // Predicated region
    $region26: #{encoder_block_forward.7} parent=1 // pred_check
      _
    $region27: #{encoder_block_forward.7} parent=1 // pred_check_branch
      %38 = sbr.rel (0) target = $region29
    $region28: #{encoder_block_forward.7} parent=1 // pred_region
      _
    $region29: #{encoder_block_forward.7} parent=1 // pred_fallthru
      _
    // Predicated region
    $region30: #{encoder_block_forward.7} parent=1 // pred_check
      _
    $region31: #{encoder_block_forward.7} parent=1 // pred_check_branch
      %40 = sbr.rel (0) target = $region33
    $region32: #{encoder_block_forward.7} parent=1 // pred_region
      _
    $region33: #{encoder_block_forward.7} parent=1 // pred_fallthru
      _
    // Predicated region
    $region34: #{encoder_block_forward.7} parent=1 // pred_check
      _
    $region35: #{encoder_block_forward.7} parent=1 // pred_check_branch
      %42 = sbr.rel (0) target = $region37
    $region36: #{encoder_block_forward.7} parent=1 // pred_region
      _
    $region37: #{encoder_block_forward.7} parent=1 // pred_fallthru
      _
    // Predicated region
    $region38: #{encoder_block_forward.7} parent=1 // pred_check
      _
    $region39: #{encoder_block_forward.7} parent=1 // pred_check_branch
      %44 = sbr.rel (0) target = $region41
    $region40: #{encoder_block_forward.7} parent=1 // pred_region
      _
    $region41: #{encoder_block_forward.7} parent=1 // pred_fallthru
      _
    // Predicated region
    $region42: #{encoder_block_forward.7} parent=1 // pred_check
      _
    $region43: #{encoder_block_forward.7} parent=1 // pred_check_branch
      %46 = sbr.rel (0) target = $region45
    $region44: #{encoder_block_forward.7} parent=1 // pred_region
      _
    $region45: #{encoder_block_forward.7} parent=1 // pred_fallthru
      _
    // Predicated region
    $region46: #{encoder_block_forward.7} parent=1 // pred_check
      _
    $region47: #{encoder_block_forward.7} parent=1 // pred_check_branch
      %48 = sbr.rel (0) target = $region49
    $region48: #{encoder_block_forward.7} parent=1 // pred_region
      _
    $region49: #{encoder_block_forward.7} parent=1 // pred_fallthru
      _
    // Predicated region
    $region50: #{encoder_block_forward.7} parent=1 // pred_check
      _
    $region51: #{encoder_block_forward.7} parent=1 // pred_check_branch
      %50 = sbr.rel (0) target = $region53
    $region52: #{encoder_block_forward.7} parent=1 // pred_region
      _
    $region53: #{encoder_block_forward.7} parent=1 // pred_fallthru
      _
    // Predicated region
    $region54: #{encoder_block_forward.7} parent=1 // pred_check
      _
    $region55: #{encoder_block_forward.7} parent=1 // pred_check_branch
      %52 = sbr.rel (0) target = $region57
    $region56: #{encoder_block_forward.7} parent=1 // pred_region
      _
    $region57: #{encoder_block_forward.7} parent=1 // pred_fallthru
      _
    // Predicated region
    $region58: #{encoder_block_forward.7} parent=1 // pred_check
      _
    $region59: #{encoder_block_forward.7} parent=1 // pred_check_branch
      %54 = sbr.rel (0) target = $region61
    $region60: #{encoder_block_forward.7} parent=1 // pred_region
      _
    $region61: #{encoder_block_forward.7} parent=1 // pred_fallthru
      _
    // Predicated region
    $region62: #{encoder_block_forward.7} parent=1 // pred_check
      _
    $region63: #{encoder_block_forward.7} parent=1 // pred_check_branch
      %56 = sbr.rel (0) target = $region65
    $region64: #{encoder_block_forward.7} parent=1 // pred_region
      _
    $region65: #{encoder_block_forward.7} parent=1 // pred_fallthru
      _
    %v58 = vld [vmem:[%s0] sm:$0xff]
    %v59 = vld [vmem:[%s0 + $0x8] sm:$0xff]
    %v60 = vld [vmem:[%s1] sm:$0xff]
    %v61 = vld [vmem:[%s1 + $0x8] sm:$0xff]
    %v62 = vadd.f32 %v58, %v60
    %v63 = vadd.f32 %v59, %v61
    %v64 = vpack.c.bf16 %v63, %v62
    %v65 = vpack.c.bf16 %v59, %v58
    %v66 = vld [vmem:[%s2] sm:$0xf]
    %v67 = vld [vmem:[%s2 + $0x4] sm:$0xf]
    %v68 = vld [vmem:[%s2 + $0x8] sm:$0xf]
    %v69 = vld [vmem:[%s2 + $0xc] sm:$0xf]
    %v74 = vunpack.c.l.b16 %v66
    %v75 = vunpack.c.l.b16 %v67
    %v76 = vunpack.c.l.b16 %v68
    %v77 = vunpack.c.l.b16 %v69
    %v78 = vpack.c.b16 %v75, %v74
    %v79 = vpack.c.b16 %v77, %v76
    %vm82 = vcmask 261120
    %v84 = vsel %vm82, %v65, 0
    %86 = vmatpush.bf16.msra.mxu0 0
    %87 = vmatpush.bf16.msra.mxu0 0
    %88 = vmatpush.bf16.msra.mxu0 0
    %89 = vmatpush.bf16.msra.mxu0 0
    %90 = vmatpush.bf16.msra.mxu0 0
    %91 = vmatpush.bf16.msra.mxu0 0
    %92 = vmatpush.bf16.msra.mxu0 %v79
    %93 = vmatpush.bf16.msra.mxu0 %v78
    %94 = vmatmul.bf16.gmra.mxu0 %v84
    %v95 = vpop.f32.mrf.mxu0
    %v96 = vadd.f32 0.0, %v95
    %v97 = vpop.f32.mrf.mxu0
    %v98 = vadd.f32 0.0, %v97
    %99 = vdwg.mxu0
    %v100 = vpack.c.bf16 %v61, %v60
    %v101 = vld [vmem:[%s3] sm:$0xf]
    %v102 = vld [vmem:[%s3 + $0x4] sm:$0xf]
    %v103 = vld [vmem:[%s3 + $0x8] sm:$0xf]
    %v104 = vld [vmem:[%s3 + $0xc] sm:$0xf]
    %v109 = vunpack.c.l.b16 %v101
    %v110 = vunpack.c.l.b16 %v102
    %v111 = vunpack.c.l.b16 %v103
    %v112 = vunpack.c.l.b16 %v104
    %v113 = vpack.c.b16 %v110, %v109
    %v114 = vpack.c.b16 %v112, %v111
    %v118 = vsel %vm82, %v100, 0
    %120 = vmatpush.bf16.msra.mxu0 0
    %121 = vmatpush.bf16.msra.mxu0 0
    %122 = vmatpush.bf16.msra.mxu0 0
    %123 = vmatpush.bf16.msra.mxu0 0
    %124 = vmatpush.bf16.msra.mxu0 0
    %125 = vmatpush.bf16.msra.mxu0 0
    %126 = vmatpush.bf16.msra.mxu0 %v114
    %127 = vmatpush.bf16.msra.mxu0 %v113
    %128 = vmatmul.bf16.gmra.mxu0 %v118
    %v129 = vpop.f32.mrf.mxu0
    %v130 = vadd.f32 0.0, %v129
    %v131 = vpop.f32.mrf.mxu0
    %v132 = vadd.f32 0.0, %v131
    %133 = vdwg.mxu0
    %v134 = vld [vmem:[%s4] sm:$0xf]
    %v135 = vld [vmem:[%s4 + $0x4] sm:$0xf]
    %v136 = vld [vmem:[%s4 + $0x8] sm:$0xf]
    %v137 = vld [vmem:[%s4 + $0xc] sm:$0xf]
    %v142 = vunpack.c.l.b16 %v134
    %v143 = vunpack.c.l.b16 %v135
    %v144 = vunpack.c.l.b16 %v136
    %v145 = vunpack.c.l.b16 %v137
    %v146 = vpack.c.b16 %v143, %v142
    %v147 = vpack.c.b16 %v145, %v144
    %v151 = vsel %vm82, %v64, 0
    %153 = vmatpush.bf16.msra.mxu0 0
    %154 = vmatpush.bf16.msra.mxu0 0
    %155 = vmatpush.bf16.msra.mxu0 0
    %156 = vmatpush.bf16.msra.mxu0 0
    %157 = vmatpush.bf16.msra.mxu0 0
    %158 = vmatpush.bf16.msra.mxu0 0
    %159 = vmatpush.bf16.msra.mxu0 %v147
    %160 = vmatpush.bf16.msra.mxu0 %v146
    %161 = vmatmul.bf16.gmra.mxu0 %v151
    %v162 = vpop.f32.mrf.mxu0
    %v163 = vadd.f32 0.0, %v162
    %v164 = vpop.f32.mrf.mxu0
    %v165 = vadd.f32 0.0, %v164
    %166 = vdwg.mxu0
    %v167 = vsub.f32 %v96, %v130
    %v168 = vsub.f32 %v98, %v132
    %v169 = vld [vmem:[%s5] sm:$0x1]
    %v171 = vperm.slane %v169, 0
    %v173 = vadd.f32 %v167, %v171
    %v174 = vadd.f32 %v168, %v171
    %v175 = vmax.f32 %v173, 0.0
    %v176 = vmax.f32 %v174, 0.0
    %v177 = vsub.f32 %v163, %v96
    %v178 = vsub.f32 %v165, %v98
    %v179 = vsub.f32 %v177, %v130
    %v180 = vsub.f32 %v178, %v132
    %v181 = vld [vmem:[%s6] sm:$0x1]
    %v183 = vperm.slane %v181, 0
    %v185 = vadd.f32 %v179, %v183
    %v186 = vadd.f32 %v180, %v183
    %v187 = vmax.f32 %v185, 0.0
    %v188 = vmax.f32 %v186, 0.0
    %v189 = vadd.f32 %v175, %v187
    %v190 = vadd.f32 %v176, %v188
    %v191 = vpack.c.bf16 %v190, %v189
    %v192 = vpack.c.bf16 %v176, %v175
    %v193 = vld [vmem:[%s7] sm:$0xf]
    %v194 = vld [vmem:[%s7 + $0x4] sm:$0xf]
    %v195 = vld [vmem:[%s7 + $0x8] sm:$0xf]
    %v196 = vld [vmem:[%s7 + $0xc] sm:$0xf]
    %v197 = vld [vmem:[%s7 + $0x10] sm:$0xf]
    %v198 = vld [vmem:[%s7 + $0x14] sm:$0xf]
    %v199 = vld [vmem:[%s7 + $0x18] sm:$0xf]
    %v200 = vld [vmem:[%s7 + $0x1c] sm:$0xf]
    %v209 = vunpack.c.l.b16 %v193
    %v210 = vunpack.c.l.b16 %v194
    %v211 = vunpack.c.l.b16 %v195
    %v212 = vunpack.c.l.b16 %v196
    %v213 = vunpack.c.l.b16 %v197
    %v214 = vunpack.c.l.b16 %v198
    %v215 = vunpack.c.l.b16 %v199
    %v216 = vunpack.c.l.b16 %v200
    %v217 = vpack.c.b16 %v210, %v209
    %v218 = vpack.c.b16 %v212, %v211
    %v219 = vpack.c.b16 %v214, %v213
    %v220 = vpack.c.b16 %v216, %v215
    %vm225 = vcmask 523264
    %v227 = vsel %vm225, %v192, 0
    %229 = vmatpush.bf16.msra.mxu0 0
    %230 = vmatpush.bf16.msra.mxu0 0
    %231 = vmatpush.bf16.msra.mxu0 0
    %232 = vmatpush.bf16.msra.mxu0 0
    %233 = vmatpush.bf16.msra.mxu0 %v220
    %234 = vmatpush.bf16.msra.mxu0 %v219
    %235 = vmatpush.bf16.msra.mxu0 %v218
    %236 = vmatpush.bf16.msra.mxu0 %v217
    %237 = vmatmul.bf16.gmra.mxu0 %v227
    %v238 = vpop.f32.mrf.mxu0
    %v239 = vadd.f32 0.0, %v238
    %v240 = vpop.f32.mrf.mxu0
    %v241 = vadd.f32 0.0, %v240
    %242 = vdwg.mxu0
    %v243 = vpack.c.bf16 %v188, %v187
    %v244 = vld [vmem:[%s8] sm:$0xf]
    %v245 = vld [vmem:[%s8 + $0x4] sm:$0xf]
    %v246 = vld [vmem:[%s8 + $0x8] sm:$0xf]
    %v247 = vld [vmem:[%s8 + $0xc] sm:$0xf]
    %v248 = vld [vmem:[%s8 + $0x10] sm:$0xf]
    %v249 = vld [vmem:[%s8 + $0x14] sm:$0xf]
    %v250 = vld [vmem:[%s8 + $0x18] sm:$0xf]
    %v251 = vld [vmem:[%s8 + $0x1c] sm:$0xf]
    %v260 = vunpack.c.l.b16 %v244
    %v261 = vunpack.c.l.b16 %v245
    %v262 = vunpack.c.l.b16 %v246
    %v263 = vunpack.c.l.b16 %v247
    %v264 = vunpack.c.l.b16 %v248
    %v265 = vunpack.c.l.b16 %v249
    %v266 = vunpack.c.l.b16 %v250
    %v267 = vunpack.c.l.b16 %v251
    %v268 = vpack.c.b16 %v261, %v260
    %v269 = vpack.c.b16 %v263, %v262
    %v270 = vpack.c.b16 %v265, %v264
    %v271 = vpack.c.b16 %v267, %v266
    %v277 = vsel %vm225, %v243, 0
    %279 = vmatpush.bf16.msra.mxu0 0
    %280 = vmatpush.bf16.msra.mxu0 0
    %281 = vmatpush.bf16.msra.mxu0 0
    %282 = vmatpush.bf16.msra.mxu0 0
    %283 = vmatpush.bf16.msra.mxu0 %v271
    %284 = vmatpush.bf16.msra.mxu0 %v270
    %285 = vmatpush.bf16.msra.mxu0 %v269
    %286 = vmatpush.bf16.msra.mxu0 %v268
    %287 = vmatmul.bf16.gmra.mxu0 %v277
    %v288 = vpop.f32.mrf.mxu0
    %v289 = vadd.f32 0.0, %v288
    %v290 = vpop.f32.mrf.mxu0
    %v291 = vadd.f32 0.0, %v290
    %292 = vdwg.mxu0
    %v293 = vld [vmem:[%s9] sm:$0xf]
    %v294 = vld [vmem:[%s9 + $0x4] sm:$0xf]
    %v295 = vld [vmem:[%s9 + $0x8] sm:$0xf]
    %v296 = vld [vmem:[%s9 + $0xc] sm:$0xf]
    %v297 = vld [vmem:[%s9 + $0x10] sm:$0xf]
    %v298 = vld [vmem:[%s9 + $0x14] sm:$0xf]
    %v299 = vld [vmem:[%s9 + $0x18] sm:$0xf]
    %v300 = vld [vmem:[%s9 + $0x1c] sm:$0xf]
    %v309 = vunpack.c.l.b16 %v293
    %v310 = vunpack.c.l.b16 %v294
    %v311 = vunpack.c.l.b16 %v295
    %v312 = vunpack.c.l.b16 %v296
    %v313 = vunpack.c.l.b16 %v297
    %v314 = vunpack.c.l.b16 %v298
    %v315 = vunpack.c.l.b16 %v299
    %v316 = vunpack.c.l.b16 %v300
    %v317 = vpack.c.b16 %v310, %v309
    %v318 = vpack.c.b16 %v312, %v311
    %v319 = vpack.c.b16 %v314, %v313
    %v320 = vpack.c.b16 %v316, %v315
    %v326 = vsel %vm225, %v191, 0
    %328 = vmatpush.bf16.msra.mxu0 0
    %329 = vmatpush.bf16.msra.mxu0 0
    %330 = vmatpush.bf16.msra.mxu0 0
    %331 = vmatpush.bf16.msra.mxu0 0
    %332 = vmatpush.bf16.msra.mxu0 %v320
    %333 = vmatpush.bf16.msra.mxu0 %v319
    %334 = vmatpush.bf16.msra.mxu0 %v318
    %335 = vmatpush.bf16.msra.mxu0 %v317
    %336 = vmatmul.bf16.gmra.mxu0 %v326
    %v337 = vpop.f32.mrf.mxu0
    %v338 = vadd.f32 0.0, %v337
    %v339 = vpop.f32.mrf.mxu0
    %v340 = vadd.f32 0.0, %v339
    %341 = vdwg.mxu0
    %v342 = vsub.f32 %v239, %v289
    %v343 = vsub.f32 %v241, %v291
    %v344 = vld [vmem:[%s10] sm:$0x1]
    %v346 = vperm.slane %v344, 0
    %v348 = vadd.f32 %v342, %v346
    %v349 = vadd.f32 %v343, %v346
    %v350 = vsub.f32 %v338, %v239
    %v351 = vsub.f32 %v340, %v241
    %v352 = vsub.f32 %v350, %v289
    %v353 = vsub.f32 %v351, %v291
    %v354 = vld [vmem:[%s11] sm:$0x1]
    %v356 = vperm.slane %v354, 0
    %v358 = vadd.f32 %v352, %v356
    %v359 = vadd.f32 %v353, %v356
    %v360 = vadd.f32 %v58, %v348
    %v361 = vadd.f32 %v59, %v349
    %v362 = vadd.f32 %v60, %v358
    %v363 = vadd.f32 %v61, %v359
    %v364 = vld [vmem:[%s12] sm:$0x1]
    %v365 = vld [vmem:[%s13] sm:$0x1]
    %v366 = vsel %vm82, %v360, 0.0
    %367 = vadd.xlane.f32.xlu0 %v366
    %v368 = vpop.xlane.xlu0 %367
    %v369 = vsel %vm82, %v361, 0.0
    %370 = vadd.xlane.f32.xlu0 %v369
    %v371 = vpop.xlane.xlu0 %370
    %v372 = vrcp.pop 32.0
    %v373 = vmul.f32 32.0, %v372
    %v374 = vsub.f32 1.0, %v373
    %v375 = vmul.f32 %v372, %v374
    %v376 = vadd.f32 %v372, %v375
    %vm377 = vweird.f32 %v372
    %v378 = vsel %vm377, %v372, %v376
    %v379 = vmul.f32 %v368, %v378
    %v380 = vmul.f32 %v371, %v378
    %v381 = vsub.f32 %v360, %v379
    %v382 = vsub.f32 %v361, %v380
    %v383 = vmul.f32 %v381, %v381
    %v384 = vmul.f32 %v382, %v382
    %v385 = vsel %vm82, %v383, 0.0
    %386 = vadd.xlane.f32.xlu0 %v385
    %v387 = vpop.xlane.xlu0 %386
    %v388 = vsel %vm82, %v384, 0.0
    %389 = vadd.xlane.f32.xlu0 %v388
    %v390 = vpop.xlane.xlu0 %389
    %v391 = vmul.f32 %v387, %v378
    %v392 = vmul.f32 %v390, %v378
    %v393 = vadd.f32 %v391, 1e-05
    %v394 = vadd.f32 %v392, 1e-05
    %v395 = vrsqrt.pop %v393
    %v396 = vmul.f32 %v395, %v393
    %v397 = vmul.f32 %v396, %v395
    %v398 = vmul.f32 0.5, %v397
    %v399 = vsub.f32 1.5, %v398
    %v400 = vmul.f32 %v395, %v399
    %vm401 = vweird.f32 %v393
    %vm402 = vweird.f32 %v395
    %vm403 = vmor %vm401, %vm402
    %v404 = vsel %vm403, %v395, %v400
    %v405 = vrsqrt.pop %v394
    %v406 = vmul.f32 %v405, %v394
    %v407 = vmul.f32 %v406, %v405
    %v408 = vmul.f32 0.5, %v407
    %v409 = vsub.f32 1.5, %v408
    %v410 = vmul.f32 %v405, %v409
    %vm411 = vweird.f32 %v394
    %vm412 = vweird.f32 %v405
    %vm413 = vmor %vm411, %vm412
    %v414 = vsel %vm413, %v405, %v410
    %v415 = vmul.f32 %v381, %v404
    %v416 = vmul.f32 %v382, %v414
    %v418 = vperm.slane %v364, 0
    %v420 = vmul.f32 %v415, %v418
    %v421 = vmul.f32 %v416, %v418
    %v423 = vperm.slane %v365, 0
    %v425 = vadd.f32 %v420, %v423
    %v426 = vadd.f32 %v421, %v423
    %427 = vst.msk [vmem:[#allocation2] sm:$0xff] %vm82, %v425
    %428 = vst.msk [vmem:[#allocation2 + $0x8] sm:$0xff] %vm82, %v426
    %v429 = vld [vmem:[%s14] sm:$0x1]
    %v430 = vld [vmem:[%s15] sm:$0x1]
    %v431 = vsel %vm82, %v362, 0.0
    %432 = vadd.xlane.f32.xlu0 %v431
    %v433 = vpop.xlane.xlu0 %432
    %v434 = vsel %vm82, %v363, 0.0
    %435 = vadd.xlane.f32.xlu0 %v434
    %v436 = vpop.xlane.xlu0 %435
    %v437 = vmul.f32 %v433, %v378
    %v438 = vmul.f32 %v436, %v378
    %v439 = vsub.f32 %v362, %v437
    %v440 = vsub.f32 %v363, %v438
    %v441 = vmul.f32 %v439, %v439
    %v442 = vmul.f32 %v440, %v440
    %v443 = vsel %vm82, %v441, 0.0
    %444 = vadd.xlane.f32.xlu0 %v443
    %v445 = vpop.xlane.xlu0 %444
    %v446 = vsel %vm82, %v442, 0.0
    %447 = vadd.xlane.f32.xlu0 %v446
    %v448 = vpop.xlane.xlu0 %447
    %v449 = vmul.f32 %v445, %v378
    %v450 = vmul.f32 %v448, %v378
    %v451 = vadd.f32 %v449, 1e-05
    %v452 = vadd.f32 %v450, 1e-05
    %v453 = vrsqrt.pop %v451
    %v454 = vmul.f32 %v453, %v451
    %v455 = vmul.f32 %v454, %v453
    %v456 = vmul.f32 0.5, %v455
    %v457 = vsub.f32 1.5, %v456
    %v458 = vmul.f32 %v453, %v457
    %vm459 = vweird.f32 %v451
    %vm460 = vweird.f32 %v453
    %vm461 = vmor %vm459, %vm460
    %v462 = vsel %vm461, %v453, %v458
    %v463 = vrsqrt.pop %v452
    %v464 = vmul.f32 %v463, %v452
    %v465 = vmul.f32 %v464, %v463
    %v466 = vmul.f32 0.5, %v465
    %v467 = vsub.f32 1.5, %v466
    %v468 = vmul.f32 %v463, %v467
    %vm469 = vweird.f32 %v452
    %vm470 = vweird.f32 %v463
    %vm471 = vmor %vm469, %vm470
    %v472 = vsel %vm471, %v463, %v468
    %v473 = vmul.f32 %v439, %v462
    %v474 = vmul.f32 %v440, %v472
    %v476 = vperm.slane %v429, 0
    %v478 = vmul.f32 %v473, %v476
    %v479 = vmul.f32 %v474, %v476
    %v481 = vperm.slane %v430, 0
    %v483 = vadd.f32 %v478, %v481
    %v484 = vadd.f32 %v479, %v481
    %485 = vst.msk [vmem:[#allocation4] sm:$0xff] %vm82, %v483
    %486 = vst.msk [vmem:[#allocation4 + $0x8] sm:$0xff] %vm82, %v484
    // Predicated region
    $region66: #{encoder_block_forward.7} parent=1 // pred_check
      _
    $region67: #{encoder_block_forward.7} parent=1 // pred_check_branch
      %488 = sbr.rel (0) target = $region69
    $region68: #{encoder_block_forward.7} parent=1 // pred_region
      %490 = vsyncadd [#allocation3], 0
      %s491 = sshll.u32 [#allocation2], 4
      %s492 = int_to_ptr.vmem [resolvable:$true] %s491
      %s493 = sshll.u32 %s16, 4
      %s494 = int_to_ptr.hbm [resolvable:$true] %s493
      %499 = dma.vmem_to_hbm [thread:$0]  %s492, 256, %s494, [#allocation3], 128, 128, 8
    $region69: #{encoder_block_forward.7} parent=1 // pred_fallthru
      _
    // Predicated region
    $region70: #{encoder_block_forward.7} parent=1 // pred_check
      _
    $region71: #{encoder_block_forward.7} parent=1 // pred_check_branch
      %501 = sbr.rel (0) target = $region73
    $region72: #{encoder_block_forward.7} parent=1 // pred_region
      %503 = vsyncadd [#allocation5], 0
      %s504 = sshll.u32 [#allocation4], 4
      %s505 = int_to_ptr.vmem [resolvable:$true] %s504
      %s506 = sshll.u32 %s17, 4
      %s507 = int_to_ptr.hbm [resolvable:$true] %s506
      %512 = dma.vmem_to_hbm [thread:$0]  %s505, 256, %s507, [#allocation5], 128, 128, 8
    $region73: #{encoder_block_forward.7} parent=1 // pred_fallthru
      _
    // Predicated region
    $region74: #{encoder_block_forward.7} parent=1 // pred_check
      _
    $region75: #{encoder_block_forward.7} parent=1 // pred_check_branch
      %514 = sbr.rel (0) target = $region77
    $region76: #{encoder_block_forward.7} parent=1 // pred_region
      %516 = dma.done [#allocation3], 256
    $region77: #{encoder_block_forward.7} parent=1 // pred_fallthru
      _
    // Predicated region
    $region78: #{encoder_block_forward.7} parent=1 // pred_check
      _
    $region79: #{encoder_block_forward.7} parent=1 // pred_check_branch
      %518 = sbr.rel (0) target = $region81
    $region80: #{encoder_block_forward.7} parent=1 // pred_region
      %520 = dma.done [#allocation5], 256
    $region81: #{encoder_block_forward.7} parent=1 // pred_fallthru
      _
    %521 = vsyncpa [#allocation3], 1
    %522 = vsyncpa [#allocation5], 1

</llo_original>
